<compile_context>
chip_gen: v5e
topology: v5e:2x2
jax: 0.10.0
libtpu: 0.0.40
codegen_flags: <defaults>
</compile_context>

<pallas_src>
import jax
import jax.numpy as jnp
import numpy as np
from jax.experimental import pallas as pl
from jax.experimental.pallas import tpu as pltpu


def _gcn_kernel(x_ref, a_ref, w_ref, b_ref, alpha_ref, out_ref):
    # Static block dims.
    Bt, N, _ = a_ref.shape              # Bt subgraphs of N (= subgraph_size) nodes
    Fout = w_ref.shape[1]

    alpha = alpha_ref[0, 0]             # PReLU slope (scalar, SMEM)
    bias = b_ref[...]                   # (1, Fout) f32

    # One big projection matmul for the whole block: (Bt*N, Fin) @ (Fin, Fout),
    # bf16 operands, f32 accumulation on the MXU.
    xw = jnp.dot(x_ref[...], w_ref[...],
                 preferred_element_type=jnp.float32)          # (Bt*N, Fout)
    xw3 = xw.reshape(Bt, N, Fout)                             # (Bt, N, Fout)

    # Anchor output reuses XW row 0 of each subgraph (original, non-zeroed features).
    anchor = xw3[:, 0, :] + bias                              # (Bt, Fout)
    anchor = jnp.where(anchor > 0, anchor, alpha * anchor)    # PReLU

    # GraphConv input has the anchor rows zeroed (in_feat[::subgraph_size] = 0);
    # zeroing X then projecting == zeroing the corresponding rows of XW.
    node_id = jax.lax.broadcasted_iota(jnp.int32, (Bt, N, 1), 1)
    xw_z = jnp.where(node_id != 0, xw3, 0.0)                  # (Bt, N, Fout)

    # norm='none' GraphConv with edge weights:  h[b, i] = sum_j a[b, i, j] * xw_z[b, j].
    # N is tiny (subgraph_size = 4), so unroll on the VPU instead of Bt tiny MXU matmuls.
    a3 = a_ref[...].astype(jnp.float32)                       # (Bt, N, N)
    agg = a3[:, :, 0:1] * xw_z[:, 0:1, :]
    for j in range(1, N):
        agg = agg + a3[:, :, j:j + 1] * xw_z[:, j:j + 1, :]   # (Bt, N, Fout)

    h = agg + bias
    h = jnp.where(h > 0, h, alpha * h)                        # PReLU
    pool = jnp.mean(h, axis=1)                                # AvgPooling -> (Bt, Fout)

    # F.normalize(p=2, dim=1), eps = 1e-12 (rsqrt runs on the EUP slot).
    def l2norm(v):
        ss = jnp.sum(v * v, axis=-1, keepdims=True)
        return v * jax.lax.rsqrt(jnp.maximum(ss, 1e-24))

    # Merged, lane-dense output block (Bt, 2*Fout): [pool | anchor].
    out_ref[:, 0:Fout] = l2norm(pool)
    out_ref[:, Fout:2 * Fout] = l2norm(anchor)


def one_layer_gcn_global_adg(x, a, w, bias, alpha, *, block_b=32):
    """x: (B*N, Fin) node features, a: (B, N, N) weighted adjacency (a[b,i,j] = w(j->i)),
    w: (Fin, Fout), bias: (1, Fout), alpha: (1, 1) PReLU slope.
    Returns (pool_norm (B, Fout), anchor_norm (B, Fout))."""
    BN, Fin = x.shape
    B, N, _ = a.shape
    assert BN == B * N
    Fout = w.shape[1]
    assert B % block_b == 0, "demo requires block_b | B"
    grid_b = B // block_b

    # bf16 for the HBM-dominant operands; accumulation inside the kernel stays f32.
    x_bf = x.astype(jnp.bfloat16)
    a_bf = a.astype(jnp.bfloat16)
    w_bf = w.astype(jnp.bfloat16)
    bias = bias.astype(jnp.float32)
    alpha = alpha.astype(jnp.float32)

    out = pl.pallas_call(
        _gcn_kernel,
        out_shape=jax.ShapeDtypeStruct((B, 2 * Fout), jnp.float32),
        grid_spec=pltpu.PrefetchScalarGridSpec(
            num_scalar_prefetch=0,
            grid=(grid_b,),
            in_specs=[
                pl.BlockSpec((block_b * N, Fin), lambda b: (b, 0)),   # node features
                pl.BlockSpec((block_b, N, N), lambda b: (b, 0, 0)),   # adjacency
                pl.BlockSpec((Fin, Fout), lambda b: (0, 0)),          # weight (const)
                pl.BlockSpec((1, Fout), lambda b: (0, 0)),            # bias (const)
                pl.BlockSpec(memory_space=pltpu.MemorySpace.SMEM),    # PReLU alpha
            ],
            out_specs=pl.BlockSpec((block_b, 2 * Fout), lambda b: (b, 0)),
        ),
        compiler_params=pltpu.CompilerParams(
            dimension_semantics=("parallel",),     # shards blocks across v7x's 2 TCs
            vmem_limit_bytes=32 * 1024 * 1024,     # explicit; far below all generations
        ),
    )(x_bf, a_bf, w_bf, bias, alpha)

    return out[:, :Fout], out[:, Fout:]


def _reference(x_flat, a, w, bias, alpha):
    """Pure-JAX reference of the module's forward (same dense layout)."""
    B, N, _ = a.shape
    Fin = x_flat.shape[1]
    x3 = x_flat.reshape(B, N, Fin)
    alpha_s = alpha[0, 0]

    anchor = jnp.einsum("bf,fo->bo", x3[:, 0, :], w, precision="highest") + bias
    anchor = jnp.where(anchor > 0, anchor, alpha_s * anchor)

    x3z = x3.at[:, 0, :].set(0.0)
    xw = jnp.einsum("bnf,fo->bno", x3z, w, precision="highest")
    h = jnp.einsum("bij,bjo->bio", a, xw, precision="highest") + bias
    h = jnp.where(h > 0, h, alpha_s * h)
    pool = h.mean(axis=1)

    def l2n(v):
        return v / jnp.maximum(jnp.linalg.norm(v, axis=-1, keepdims=True), 1e-12)

    return l2n(pool), l2n(anchor)


if __name__ == "__main__":
    # Module defaults: subgraph_size = 4, out_feats = 64.
    B, N, Fin, Fout = 64, 4, 32, 64
    Bt = 32                                   # subgraphs per grid step -> grid = (2,)

    key = jax.random.PRNGKey(0)
    kx, kmask, kw_, kweight, kb = jax.random.split(key, 5)

    # Node features (flat, subgraph-major like the batched DGL graph).
    x = jax.random.normal(kx, (B * N, Fin), dtype=jnp.float32)

    # Random subgraph structure with self-loops and positive edge weights (bg.edata['w']).
    mask = (jax.random.uniform(kmask, (B, N, N)) < 0.6).astype(jnp.float32)
    eye = jnp.broadcast_to(jnp.eye(N, dtype=jnp.float32), (B, N, N))
    mask = jnp.maximum(mask, eye)
    ew = jax.random.uniform(kweight, (B, N, N), minval=0.5, maxval=1.5)
    a = mask * ew

    # GraphConv parameters (Xavier-like) and PReLU slope (nn.PReLU default 0.25).
    w = jax.random.normal(kw_, (Fin, Fout), dtype=jnp.float32) * (1.0 / np.sqrt(Fin))
    bias = 0.1 * jax.random.normal(kb, (1, Fout), dtype=jnp.float32)
    alpha = jnp.full((1, 1), 0.25, dtype=jnp.float32)

    pool, anchor = one_layer_gcn_global_adg(x, a, w, bias, alpha, block_b=Bt)
    jax.block_until_ready((pool, anchor))

    # Reference on the same bf16-rounded inputs the kernel consumes.
    xr = x.astype(jnp.bfloat16).astype(jnp.float32)
    ar = a.astype(jnp.bfloat16).astype(jnp.float32)
    wr = w.astype(jnp.bfloat16).astype(jnp.float32)
    pool_ref, anchor_ref = _reference(xr, ar, wr, bias, alpha)

    np.testing.assert_allclose(np.asarray(pool), np.asarray(pool_ref), atol=2e-4, rtol=2e-4)
    np.testing.assert_allclose(np.asarray(anchor), np.asarray(anchor_ref), atol=2e-4, rtol=2e-4)

    print("KERNEL_OK")
</pallas_src>

<mosaic_0001>
module attributes {stable_mosaic.version = 11 : i64} {
  func.func @_gcn_kernel(%arg0: i32, %arg1: memref<128x32xbf16, #tpu.memory_space<vmem>>, %arg2: memref<32x4x4xbf16, #tpu.memory_space<vmem>>, %arg3: memref<32x64xbf16, #tpu.memory_space<vmem>>, %arg4: memref<1x64xf32, #tpu.memory_space<vmem>>, %arg5: memref<1x1xf32, #tpu.memory_space<smem>>, %arg6: memref<32x128xf32, #tpu.memory_space<vmem>>) attributes {dimension_semantics = [#tpu.dimension_semantics<parallel>], iteration_bounds = array<i64: 2>, scalar_prefetch = 0 : i64, scratch_operands = 0 : i64, tpu.core_type = #tpu.core_type<tc>, window_params = [{transform_indices = @transform_0, window_bounds = array<i64: 128, 32>}, {transform_indices = @transform_1, window_bounds = array<i64: 32, 4, 4>}, {pipeline_mode = #tpu.pipeline_mode<synchronous>, transform_indices = @transform_2, window_bounds = array<i64: 32, 64>}, {pipeline_mode = #tpu.pipeline_mode<synchronous>, transform_indices = @transform_3, window_bounds = array<i64: 1, 64>}, {transform_indices = @transform_4, window_bounds = array<i64: 1, 1>}, {transform_indices = @transform_5, window_bounds = array<i64: 32, 128>}]} {
    %c0 = arith.constant 0 : index
    %c0_0 = arith.constant 0 : index
    %0 = memref.load %arg5[%c0, %c0_0] : memref<1x1xf32, #tpu.memory_space<smem>>
    %c0_1 = arith.constant 0 : index
    %c0_2 = arith.constant 0 : index
    %1 = vector.load %arg4[%c0_1, %c0_2] : memref<1x64xf32, #tpu.memory_space<vmem>>, vector<1x64xf32>
    %c0_3 = arith.constant 0 : index
    %c0_4 = arith.constant 0 : index
    %2 = vector.load %arg1[%c0_3, %c0_4] : memref<128x32xbf16, #tpu.memory_space<vmem>>, vector<128x32xbf16>
    %c0_5 = arith.constant 0 : index
    %c0_6 = arith.constant 0 : index
    %3 = vector.load %arg3[%c0_5, %c0_6] : memref<32x64xbf16, #tpu.memory_space<vmem>>, vector<32x64xbf16>
    %cst = arith.constant dense<0.000000e+00> : vector<128x64xf32>
    %4 = tpu.matmul %2, %3, %cst {dimension_numbers = #tpu.dot_dimension_numbers<[1], [0], [0], [1], [0, 0, 1, 1], [], []>} : vector<128x32xbf16>, vector<32x64xbf16>, vector<128x64xf32> -> vector<128x64xf32>
    %5 = vector.shape_cast %4 : vector<128x64xf32> to vector<32x4x64xf32>
    %6 = vector.extract_strided_slice %5 {offsets = [0, 0, 0], sizes = [32, 1, 64], strides = [1, 1, 1]} : vector<32x4x64xf32> to vector<32x1x64xf32>
    %7 = vector.shape_cast %6 : vector<32x1x64xf32> to vector<32x64xf32>
    %8 = vector.broadcast %1 : vector<1x64xf32> to vector<32x64xf32>
    %9 = arith.addf %7, %8 : vector<32x64xf32>
    %cst_7 = arith.constant 0.000000e+00 : f32
    %10 = vector.broadcast %cst_7 : f32 to vector<32x64xf32>
    %11 = arith.cmpf ogt, %9, %10 : vector<32x64xf32>
    %12 = vector.broadcast %0 : f32 to vector<32x64xf32>
    %13 = arith.mulf %12, %9 : vector<32x64xf32>
    %14 = arith.select %11, %9, %13 : vector<32x64xi1>, vector<32x64xf32>
    %15 = tpu.iota {dimensions = array<i32: 1>} : vector<32x4x1xi32>
    %c0_i32 = arith.constant 0 : i32
    %16 = vector.broadcast %c0_i32 : i32 to vector<32x4x1xi32>
    %17 = arith.cmpi ne, %15, %16 : vector<32x4x1xi32>
    %cst_8 = arith.constant 0.000000e+00 : f32
    %18 = vector.shape_cast %17 : vector<32x4x1xi1> to vector<32x4x1xi1>
    %19 = vector.broadcast %18 : vector<32x4x1xi1> to vector<32x4x64xi1>
    %20 = vector.broadcast %cst_8 : f32 to vector<32x4x64xf32>
    %21 = arith.select %19, %5, %20 : vector<32x4x64xi1>, vector<32x4x64xf32>
    %c0_9 = arith.constant 0 : index
    %c0_10 = arith.constant 0 : index
    %c0_11 = arith.constant 0 : index
    %22 = vector.load %arg2[%c0_9, %c0_10, %c0_11] : memref<32x4x4xbf16, #tpu.memory_space<vmem>>, vector<32x4x4xbf16>
    %23 = arith.extf %22 : vector<32x4x4xbf16> to vector<32x4x4xf32>
    %24 = vector.extract_strided_slice %23 {offsets = [0, 0, 0], sizes = [32, 4, 1], strides = [1, 1, 1]} : vector<32x4x4xf32> to vector<32x4x1xf32>
    %25 = vector.extract_strided_slice %21 {offsets = [0, 0, 0], sizes = [32, 1, 64], strides = [1, 1, 1]} : vector<32x4x64xf32> to vector<32x1x64xf32>
    %26 = vector.broadcast %24 : vector<32x4x1xf32> to vector<32x4x64xf32>
    %27 = vector.broadcast %25 : vector<32x1x64xf32> to vector<32x4x64xf32>
    %28 = arith.mulf %26, %27 : vector<32x4x64xf32>
    %29 = vector.extract_strided_slice %23 {offsets = [0, 0, 1], sizes = [32, 4, 1], strides = [1, 1, 1]} : vector<32x4x4xf32> to vector<32x4x1xf32>
    %30 = vector.extract_strided_slice %21 {offsets = [0, 1, 0], sizes = [32, 1, 64], strides = [1, 1, 1]} : vector<32x4x64xf32> to vector<32x1x64xf32>
    %31 = vector.broadcast %29 : vector<32x4x1xf32> to vector<32x4x64xf32>
    %32 = vector.broadcast %30 : vector<32x1x64xf32> to vector<32x4x64xf32>
    %33 = arith.mulf %31, %32 : vector<32x4x64xf32>
    %34 = arith.addf %28, %33 : vector<32x4x64xf32>
    %35 = vector.extract_strided_slice %23 {offsets = [0, 0, 2], sizes = [32, 4, 1], strides = [1, 1, 1]} : vector<32x4x4xf32> to vector<32x4x1xf32>
    %36 = vector.extract_strided_slice %21 {offsets = [0, 2, 0], sizes = [32, 1, 64], strides = [1, 1, 1]} : vector<32x4x64xf32> to vector<32x1x64xf32>
    %37 = vector.broadcast %35 : vector<32x4x1xf32> to vector<32x4x64xf32>
    %38 = vector.broadcast %36 : vector<32x1x64xf32> to vector<32x4x64xf32>
    %39 = arith.mulf %37, %38 : vector<32x4x64xf32>
    %40 = arith.addf %34, %39 : vector<32x4x64xf32>
    %41 = vector.extract_strided_slice %23 {offsets = [0, 0, 3], sizes = [32, 4, 1], strides = [1, 1, 1]} : vector<32x4x4xf32> to vector<32x4x1xf32>
    %42 = vector.extract_strided_slice %21 {offsets = [0, 3, 0], sizes = [32, 1, 64], strides = [1, 1, 1]} : vector<32x4x64xf32> to vector<32x1x64xf32>
    %43 = vector.broadcast %41 : vector<32x4x1xf32> to vector<32x4x64xf32>
    %44 = vector.broadcast %42 : vector<32x1x64xf32> to vector<32x4x64xf32>
    %45 = arith.mulf %43, %44 : vector<32x4x64xf32>
    %46 = arith.addf %40, %45 : vector<32x4x64xf32>
    %47 = vector.shape_cast %1 : vector<1x64xf32> to vector<1x1x64xf32>
    %48 = vector.broadcast %47 : vector<1x1x64xf32> to vector<32x4x64xf32>
    %49 = arith.addf %46, %48 : vector<32x4x64xf32>
    %cst_12 = arith.constant 0.000000e+00 : f32
    %50 = vector.broadcast %cst_12 : f32 to vector<32x4x64xf32>
    %51 = arith.cmpf ogt, %49, %50 : vector<32x4x64xf32>
    %52 = vector.broadcast %0 : f32 to vector<32x4x64xf32>
    %53 = arith.mulf %52, %49 : vector<32x4x64xf32>
    %54 = arith.select %51, %49, %53 : vector<32x4x64xi1>, vector<32x4x64xf32>
    %cst_13 = arith.constant dense<0.000000e+00> : vector<32x64xf32>
    %55 = vector.multi_reduction <add>, %54, %cst_13 [1] : vector<32x4x64xf32> to vector<32x64xf32>
    %cst_14 = arith.constant 4.000000e+00 : f32
    %56 = vector.broadcast %cst_14 : f32 to vector<32x64xf32>
    %57 = arith.divf %55, %56 : vector<32x64xf32>
    %58 = arith.mulf %57, %57 : vector<32x64xf32>
    %cst_15 = arith.constant dense<0.000000e+00> : vector<32xf32>
    %59 = vector.multi_reduction <add>, %58, %cst_15 [1] : vector<32x64xf32> to vector<32xf32>
    %60 = vector.shape_cast %59 : vector<32xf32> to vector<32x1xf32>
    %cst_16 = arith.constant 1.000000e-24 : f32
    %61 = vector.broadcast %cst_16 : f32 to vector<32x1xf32>
    %62 = arith.maximumf %60, %61 : vector<32x1xf32>
    %63 = math.rsqrt %62 : vector<32x1xf32>
    %64 = vector.broadcast %63 : vector<32x1xf32> to vector<32x64xf32>
    %65 = arith.mulf %57, %64 : vector<32x64xf32>
    %c0_17 = arith.constant 0 : index
    %c0_18 = arith.constant 0 : index
    %66 = vector.load %arg6[%c0_17, %c0_18] : memref<32x128xf32, #tpu.memory_space<vmem>>, vector<32x64xf32>
    tpu.vector_store %arg6[%c0_17, %c0_18], %65 {strides = array<i32>} : memref<32x128xf32, #tpu.memory_space<vmem>>, vector<32x64xf32>,
    %67 = arith.mulf %14, %14 : vector<32x64xf32>
    %cst_19 = arith.constant dense<0.000000e+00> : vector<32xf32>
    %68 = vector.multi_reduction <add>, %67, %cst_19 [1] : vector<32x64xf32> to vector<32xf32>
    %69 = vector.shape_cast %68 : vector<32xf32> to vector<32x1xf32>
    %cst_20 = arith.constant 1.000000e-24 : f32
    %70 = vector.broadcast %cst_20 : f32 to vector<32x1xf32>
    %71 = arith.maximumf %69, %70 : vector<32x1xf32>
    %72 = math.rsqrt %71 : vector<32x1xf32>
    %73 = vector.broadcast %72 : vector<32x1xf32> to vector<32x64xf32>
    %74 = arith.mulf %14, %73 : vector<32x64xf32>
    %c0_21 = arith.constant 0 : index
    %c64 = arith.constant 64 : index
    %75 = vector.load %arg6[%c0_21, %c64] : memref<32x128xf32, #tpu.memory_space<vmem>>, vector<32x64xf32>
    tpu.vector_store %arg6[%c0_21, %c64], %74 {strides = array<i32>} : memref<32x128xf32, #tpu.memory_space<vmem>>, vector<32x64xf32>,
    return
  }
  func.func @transform_0(%arg0: i32) -> (i32, i32) {
    %c0_i32 = arith.constant 0 : i32
    %c0_i32_0 = arith.constant 0 : i32
    return %arg0, %c0_i32 : i32, i32
  }
  func.func @transform_1(%arg0: i32) -> (i32, i32, i32) {
    %c0_i32 = arith.constant 0 : i32
    %c0_i32_0 = arith.constant 0 : i32
    %c0_i32_1 = arith.constant 0 : i32
    return %arg0, %c0_i32, %c0_i32_0 : i32, i32, i32
  }
  func.func @transform_2(%arg0: i32) -> (i32, i32) {
    %c0_i32 = arith.constant 0 : i32
    %c0_i32_0 = arith.constant 0 : i32
    %c0_i32_1 = arith.constant 0 : i32
    return %c0_i32, %c0_i32_0 : i32, i32
  }
  func.func @transform_3(%arg0: i32) -> (i32, i32) {
    %c0_i32 = arith.constant 0 : i32
    %c0_i32_0 = arith.constant 0 : i32
    %c0_i32_1 = arith.constant 0 : i32
    return %c0_i32, %c0_i32_0 : i32, i32
  }
  func.func @transform_4(%arg0: i32) -> (i32, i32) {
    %c0_i32 = arith.constant 0 : i32
    %c0_i32_0 = arith.constant 0 : i32
    %c0_i32_1 = arith.constant 0 : i32
    return %c0_i32, %c0_i32_0 : i32, i32
  }
  func.func @transform_5(%arg0: i32) -> (i32, i32) {
    %c0_i32 = arith.constant 0 : i32
    %c0_i32_0 = arith.constant 0 : i32
    return %arg0, %c0_i32 : i32, i32
  }
}

</mosaic_0001>

<llo_original>
// kernel: tpu_custom_call.1
$region0: #{tpu_custom_call.1}
  #allocation0 [shape = 'u32[]', space=smem, size = 0x4, offset = 0x4, fixed_abs, tag = 'smem constant byte address 0x4 - core index']
  #allocation1 [shape = 'u32[72,128]{1,0:T(1,128)}', space=vmem, size = 0x9000, scoped, tag = 'internal scratch']
  #allocation2 [shape = 'f32[1,1]{1,0:T(1,128)S(6)}', space=smem, size = 0x200, scoped, tag = 'scoped memory for tpu_custom_call.1']
  %s0 = inlined_call_operand.vmem [shape: bf16[256,32], index: 0, kind: input, shape index: {}]
  %s1 = inlined_call_operand.vmem [shape: bf16[64,4,4], index: 1, kind: input, shape index: {}]
  %s2 = inlined_call_operand.vmem [shape: bf16[32,64], index: 2, kind: input, shape index: {}]
  %s3 = inlined_call_operand.vmem [shape: f32[1,64], index: 3, kind: input, shape index: {}]
  %s4 = inlined_call_operand.<no memory space> [shape: f32[1,1], index: 4, kind: input, shape index: {}]
  %s5 = inlined_call_operand.hbm [shape: f32[64,128], index: 5, kind: output, shape index: {}]
  %s6 = sld [smem:[#allocation0]]
  $region53: #{tpu_custom_call.1} parent=0
    _
  %s8 = ssub.s32 1, %s6
  %s9 = scalar_select 0, %s8, %s6
  %10 = sst [smem:[#allocation2]] %s4
  $region1: #{tpu_custom_call.1} parent=0
    #allocation3 [shape = 'u8[32768]{0}', space=vmem, size = 0x8000, scoped, tag = 'output window, operand 0']
    #allocation4 [shape = 's32[2]{0}', space=sflag, size = 0x8, scoped, tag = 'scoped memory for tpu_custom_call.1']
    %11 = vsyncpa [#allocation4], 0
    %s12 = scalar_lea.sflag [#allocation4], 1
    %13 = vsyncpa %s12, 0
    loop: start=0, step=1, limit=4
    $region2: #{tpu_custom_call.1} parent=1 // loop_pre_header
      _
    $region3: #{tpu_custom_call.1} parent=1 // loop_header
      %s15 = sphi 0, %s19
      %p16 = scmp.ge.s32.totalorder %s15, 4
      %s25 = sphi 0, %s27
      %s28 = sphi 0, %s25
      %s29 = sphi 0, %s28
      %s45 = sphi 0, %s29
      %s51 = sphi 0, %s53
      %s54 = sphi 0, %s51
      %s55 = sphi 0, %s54
      %s71 = sphi 0, %s55
      %s75 = sphi 0, %s75
      %s77 = sphi 0, %s75
      %s78 = sphi 0, %s77
      %s92 = sphi 0, %s78
      %s96 = sphi 0, %s96
      %s98 = sphi 0, %s96
      %s99 = sphi 0, %s98
      %s113 = sphi 0, %s99
      %s117 = sphi 0, %s117
      %s119 = sphi 0, %s117
      %s120 = sphi 0, %s119
      %s134 = sphi 0, %s120
      %s140 = sphi 0, %s142
      %s143 = sphi 0, %s140
      %s144 = sphi 0, %s143
      %s160 = sphi 0, %s144
    $region4: #{tpu_custom_call.1} parent=1 // loop_header_branch
      %18 = sbr.rel (%p16) target = $region8
    $region5: #{tpu_custom_call.1} parent=1 // loop_body
      %s20 = ssub.s32 %s15, 1
      %s21 = ssub.s32 %s15, 2
      %s22 = sadd.s32 %s15, 1
      %s23 = ssub.s32 %s15, %s22
      %p24 = scmp.eq.s32.totalorder %s23, 0
      %s26 = sadd.s32 %s25, 1
      %s27 = scalar_select %p24, %s25, %s26
      %p30 = pneg %p24
      %p31 = scmp.eq.s32.totalorder %s15, 1
      %p32 = por %p30, %p31
      %p33 = scmp.ne.s32.totalorder %s25, %s28
      %p34 = scmp.eq.s32.totalorder %s15, 0
      %p35 = por %p33, %p34
      %p36 = scmp.ne.s32.totalorder %s25, %s28
      %p37 = scmp.eq.s32.totalorder %s20, 1
      %p38 = por %p36, %p37
      %p39 = scmp.ne.s32.totalorder %s28, %s29
      %p40 = scmp.eq.s32.totalorder %s20, 0
      %p41 = por %p39, %p40
      %p42 = scmp.ne.s32.totalorder %s28, %s29
      %p43 = scmp.eq.s32.totalorder %s21, 1
      %p44 = por %p42, %p43
      %p46 = scmp.ne.s32.totalorder %s29, %s45
      %p47 = scmp.eq.s32.totalorder %s21, 0
      %p48 = por %p46, %p47
      %s49 = ssub.s32 %s15, %s22
      %p50 = scmp.eq.s32.totalorder %s49, 0
      %s52 = sadd.s32 %s51, 1
      %s53 = scalar_select %p50, %s51, %s52
      %p56 = pneg %p50
      %p57 = scmp.eq.s32.totalorder %s15, 1
      %p58 = por %p56, %p57
      %p59 = scmp.ne.s32.totalorder %s51, %s54
      %p60 = scmp.eq.s32.totalorder %s15, 0
      %p61 = por %p59, %p60
      %p62 = scmp.ne.s32.totalorder %s51, %s54
      %p63 = scmp.eq.s32.totalorder %s20, 1
      %p64 = por %p62, %p63
      %p65 = scmp.ne.s32.totalorder %s54, %s55
      %p66 = scmp.eq.s32.totalorder %s20, 0
      %p67 = por %p65, %p66
      %p68 = scmp.ne.s32.totalorder %s54, %s55
      %p69 = scmp.eq.s32.totalorder %s21, 1
      %p70 = por %p68, %p69
      %p72 = scmp.ne.s32.totalorder %s55, %s71
      %p73 = scmp.eq.s32.totalorder %s21, 0
      %p74 = por %p72, %p73
      %s76 = sadd.s32 %s75, 1
      %p79 = scmp.eq.s32.totalorder %s15, 1
      %p80 = scmp.ne.s32.totalorder %s75, %s77
      %p81 = scmp.eq.s32.totalorder %s15, 0
      %p82 = por %p80, %p81
      %p83 = scmp.ne.s32.totalorder %s75, %s77
      %p84 = scmp.eq.s32.totalorder %s20, 1
      %p85 = por %p83, %p84
      %p86 = scmp.ne.s32.totalorder %s77, %s78
      %p87 = scmp.eq.s32.totalorder %s20, 0
      %p88 = por %p86, %p87
      %p89 = scmp.ne.s32.totalorder %s77, %s78
      %p90 = scmp.eq.s32.totalorder %s21, 1
      %p91 = por %p89, %p90
      %p93 = scmp.ne.s32.totalorder %s78, %s92
      %p94 = scmp.eq.s32.totalorder %s21, 0
      %p95 = por %p93, %p94
      %s97 = sadd.s32 %s96, 1
      %p100 = scmp.eq.s32.totalorder %s15, 1
      %p101 = scmp.ne.s32.totalorder %s96, %s98
      %p102 = scmp.eq.s32.totalorder %s15, 0
      %p103 = por %p101, %p102
      %p104 = scmp.ne.s32.totalorder %s96, %s98
      %p105 = scmp.eq.s32.totalorder %s20, 1
      %p106 = por %p104, %p105
      %p107 = scmp.ne.s32.totalorder %s98, %s99
      %p108 = scmp.eq.s32.totalorder %s20, 0
      %p109 = por %p107, %p108
      %p110 = scmp.ne.s32.totalorder %s98, %s99
      %p111 = scmp.eq.s32.totalorder %s21, 1
      %p112 = por %p110, %p111
      %p114 = scmp.ne.s32.totalorder %s99, %s113
      %p115 = scmp.eq.s32.totalorder %s21, 0
      %p116 = por %p114, %p115
      %s118 = sadd.s32 %s117, 1
      %p121 = scmp.eq.s32.totalorder %s15, 1
      %p122 = scmp.ne.s32.totalorder %s117, %s119
      %p123 = scmp.eq.s32.totalorder %s15, 0
      %p124 = por %p122, %p123
      %p125 = scmp.ne.s32.totalorder %s117, %s119
      %p126 = scmp.eq.s32.totalorder %s20, 1
      %p127 = por %p125, %p126
      %p128 = scmp.ne.s32.totalorder %s119, %s120
      %p129 = scmp.eq.s32.totalorder %s20, 0
      %p130 = por %p128, %p129
      %p131 = scmp.ne.s32.totalorder %s119, %s120
      %p132 = scmp.eq.s32.totalorder %s21, 1
      %p133 = por %p131, %p132
      %p135 = scmp.ne.s32.totalorder %s120, %s134
      %p136 = scmp.eq.s32.totalorder %s21, 0
      %p137 = por %p135, %p136
      %s138 = ssub.s32 %s15, %s22
      %p139 = scmp.eq.s32.totalorder %s138, 0
      %s141 = sadd.s32 %s140, 1
      %s142 = scalar_select %p139, %s140, %s141
      %p145 = pneg %p139
      %p146 = scmp.eq.s32.totalorder %s15, 1
      %p147 = por %p145, %p146
      %p148 = scmp.ne.s32.totalorder %s140, %s143
      %p149 = scmp.eq.s32.totalorder %s15, 0
      %p150 = por %p148, %p149
      %p151 = scmp.ne.s32.totalorder %s140, %s143
      %p152 = scmp.eq.s32.totalorder %s20, 1
      %p153 = por %p151, %p152
      %p154 = scmp.ne.s32.totalorder %s143, %s144
      %p155 = scmp.eq.s32.totalorder %s20, 0
      %p156 = por %p154, %p155
      %p157 = scmp.ne.s32.totalorder %s143, %s144
      %p158 = scmp.eq.s32.totalorder %s21, 1
      %p159 = por %p157, %p158
      %p161 = scmp.ne.s32.totalorder %s144, %s160
      %p162 = scmp.eq.s32.totalorder %s21, 0
      %p163 = por %p161, %p162
      %p164 = scmp.le.s32.totalorder 1, %s15
      %p165 = scmp.lt.s32.totalorder %s15, 3
      %p166 = pnand %p164, %p165
      %p167 = pneg %p166
      // Predicated region
      $region9: #{tpu_custom_call.1} parent=5 // pred_check
        _
      $region10: #{tpu_custom_call.1} parent=5 // pred_check_branch
        %169 = sbr.rel (%p166) target = $region12
      $region11: #{tpu_custom_call.1} parent=5 // pred_region
        %s170 = ssub.s32 %s15, 1
        // Predicated region
        $region13: #{tpu_custom_call.1} parent=11 // pred_check
          %p171 = pneg %p88
        $region14: #{tpu_custom_call.1} parent=11 // pred_check_branch
          %173 = sbr.rel (%p171) target = $region16
        $region15: #{tpu_custom_call.1} parent=11 // pred_region
          _
        $region16: #{tpu_custom_call.1} parent=11 // pred_fallthru
          _
        // Predicated region
        $region17: #{tpu_custom_call.1} parent=11 // pred_check
          %p174 = pneg %p109
        $region18: #{tpu_custom_call.1} parent=11 // pred_check_branch
          %176 = sbr.rel (%p174) target = $region20
        $region19: #{tpu_custom_call.1} parent=11 // pred_region
          _
        $region20: #{tpu_custom_call.1} parent=11 // pred_fallthru
          _
        // Predicated region
        $region21: #{tpu_custom_call.1} parent=11 // pred_check
          %p177 = pneg %p130
        $region22: #{tpu_custom_call.1} parent=11 // pred_check_branch
          %179 = sbr.rel (%p177) target = $region24
        $region23: #{tpu_custom_call.1} parent=11 // pred_region
          _
        $region24: #{tpu_custom_call.1} parent=11 // pred_fallthru
          _
      $region12: #{tpu_custom_call.1} parent=5 // pred_fallthru
        _
      %p180 = scmp.lt.s32.totalorder %s15, 2
      // Predicated region
      $region25: #{tpu_custom_call.1} parent=5 // pred_check
        %p181 = pneg %p180
      $region26: #{tpu_custom_call.1} parent=5 // pred_check_branch
        %183 = sbr.rel (%p181) target = $region28
      $region27: #{tpu_custom_call.1} parent=5 // pred_region
        // Predicated region
        $region29: #{tpu_custom_call.1} parent=27 // pred_check
          %p184 = pneg %p35
        $region30: #{tpu_custom_call.1} parent=27 // pred_check_branch
          %186 = sbr.rel (%p184) target = $region32
        $region31: #{tpu_custom_call.1} parent=27 // pred_region
          %s187 = smul.u32 16, %s15
          %p188 = scmp.lt.s32.totalorder %s187, 31
          %s189 = scalar_select %p188, %s187, 31
          %s190 = smul.addr %s189, 4
          %s191 = scalar_lea.vmem %s0, %s190
          %s192 = smul.u32 16, %s15
        $region32: #{tpu_custom_call.1} parent=27 // pred_fallthru
          _
        // Predicated region
        $region33: #{tpu_custom_call.1} parent=27 // pred_check
          %p193 = pneg %p61
        $region34: #{tpu_custom_call.1} parent=27 // pred_check_branch
          %195 = sbr.rel (%p193) target = $region36
        $region35: #{tpu_custom_call.1} parent=27 // pred_region
          %s196 = smul.u32 32, %s15
          %p197 = scmp.lt.s32.totalorder %s196, 63
          %s198 = scalar_select %p197, %s196, 63
          %s199 = smul.addr %s198, 2
          %s200 = scalar_lea.vmem %s1, %s199
          %s201 = smul.u32 32, %s15
        $region36: #{tpu_custom_call.1} parent=27 // pred_fallthru
          _
      $region28: #{tpu_custom_call.1} parent=5 // pred_fallthru
        _
      %p202 = scmp.le.s32.totalorder 1, %s15
      %p203 = scmp.lt.s32.totalorder %s15, 3
      %p204 = pnand %p202, %p203
      %p205 = pneg %p204
      // Predicated region
      $region37: #{tpu_custom_call.1} parent=5 // pred_check
        _
      $region38: #{tpu_custom_call.1} parent=5 // pred_check_branch
        %207 = sbr.rel (%p204) target = $region40
      $region39: #{tpu_custom_call.1} parent=5 // pred_region
        %s208 = ssub.s32 %s15, 1
        %s209 = smul.u32 16, %s20
        %p210 = scmp.lt.s32.totalorder %s209, 31
        %s211 = scalar_select %p210, %s209, 31
        %s212 = smul.addr %s211, 4
        %s213 = scalar_lea.vmem %s0, %s212
        %p214 = pneg %p41
        %p215 = pneg %p38
        %s216 = smul.u32 32, %s20
        %p217 = scmp.lt.s32.totalorder %s216, 63
        %s218 = scalar_select %p217, %s216, 63
        %s219 = smul.addr %s218, 2
        %s220 = scalar_lea.vmem %s1, %s219
        %p221 = pneg %p67
        %p222 = pneg %p64
        %p223 = pneg %p88
        %p224 = pneg %p85
        %p225 = pneg %p109
        %p226 = pneg %p106
        %p227 = pneg %p130
        %p228 = pneg %p127
        %p229 = pneg %p156
        %p230 = pneg %p153
        %s231 = sand.u32 %s143, 1
        %s232 = scalar_lea.sflag [#allocation4], %s231
        %s233 = sand.u32 %s143, 1
        %s234 = smul.addr %s233, 32
        %s235 = scalar_lea.vmem [#allocation3], %s234
        %s236 = smul.u32 16, %s20
        %p237 = scmp.lt.s32.totalorder %s236, 31
        %s238 = scalar_select %p237, %s236, 31
        %s239 = smul.addr %s238, 4
        %s240 = scalar_lea.vmem %s0, %s239
        %s241 = smul.u32 16, %s20
        %s242 = smul.u32 32, %s20
        %p243 = scmp.lt.s32.totalorder %s242, 63
        %s244 = scalar_select %p243, %s242, 63
        %s245 = smul.addr %s244, 2
        %s246 = scalar_lea.vmem %s1, %s245
        %s247 = smul.u32 32, %s20
        %s248 = smul.u32 4, %s20
        %s250 = sld [smem:[#allocation2]]
        %v251 = vld [vmem:[%s3] sm:$0x1]
        %v252 = vld [vmem:[%s240] sm:$0xf]
        %v253 = vld [vmem:[%s240 + $0x4] sm:$0xf]
        %v254 = vld [vmem:[%s240 + $0x8] sm:$0xf]
        %v255 = vld [vmem:[%s240 + $0xc] sm:$0xf]
        %v256 = vld [vmem:[%s240 + $0x10] sm:$0xf]
        %v257 = vld [vmem:[%s240 + $0x14] sm:$0xf]
        %v258 = vld [vmem:[%s240 + $0x18] sm:$0xf]
        %v259 = vld [vmem:[%s240 + $0x1c] sm:$0xf]
        %v260 = vld [vmem:[%s240 + $0x20] sm:$0xf]
        %v261 = vld [vmem:[%s240 + $0x24] sm:$0xf]
        %v262 = vld [vmem:[%s240 + $0x28] sm:$0xf]
        %v263 = vld [vmem:[%s240 + $0x2c] sm:$0xf]
        %v264 = vld [vmem:[%s240 + $0x30] sm:$0xf]
        %v265 = vld [vmem:[%s240 + $0x34] sm:$0xf]
        %v266 = vld [vmem:[%s240 + $0x38] sm:$0xf]
        %v267 = vld [vmem:[%s240 + $0x3c] sm:$0xf]
        %v268 = vld [vmem:[%s2] sm:$0xf]
        %v269 = vld [vmem:[%s2 + $0x4] sm:$0xf]
        %v270 = vld [vmem:[%s2 + $0x8] sm:$0xf]
        %v271 = vld [vmem:[%s2 + $0xc] sm:$0xf]
        %v288 = vunpack.c.l.b16 %v252
        %v289 = vunpack.c.l.b16 %v253
        %v290 = vunpack.c.l.b16 %v254
        %v291 = vunpack.c.l.b16 %v255
        %v292 = vunpack.c.l.b16 %v256
        %v293 = vunpack.c.l.b16 %v257
        %v294 = vunpack.c.l.b16 %v258
        %v295 = vunpack.c.l.b16 %v259
        %v296 = vunpack.c.l.b16 %v260
        %v297 = vunpack.c.l.b16 %v261
        %v298 = vunpack.c.l.b16 %v262
        %v299 = vunpack.c.l.b16 %v263
        %v300 = vunpack.c.l.b16 %v264
        %v301 = vunpack.c.l.b16 %v265
        %v302 = vunpack.c.l.b16 %v266
        %v303 = vunpack.c.l.b16 %v267
        %v304 = vpack.c.b16 %v289, %v288
        %v305 = vpack.c.b16 %v291, %v290
        %v306 = vpack.c.b16 %v293, %v292
        %v307 = vpack.c.b16 %v295, %v294
        %v308 = vpack.c.b16 %v297, %v296
        %v309 = vpack.c.b16 %v299, %v298
        %v310 = vpack.c.b16 %v301, %v300
        %v311 = vpack.c.b16 %v303, %v302
        %v316 = vunpack.c.l.b16 %v268
        %v317 = vunpack.c.l.b16 %v269
        %v318 = vunpack.c.l.b16 %v270
        %v319 = vunpack.c.l.b16 %v271
        %v320 = vpack.c.b16 %v317, %v316
        %v321 = vpack.c.b16 %v319, %v318
        %vm324 = vcmask 261120
        %v326 = vsel %vm324, %v304, 0
        %v329 = vsel %vm324, %v305, 0
        %v332 = vsel %vm324, %v306, 0
        %v335 = vsel %vm324, %v307, 0
        %v338 = vsel %vm324, %v308, 0
        %v341 = vsel %vm324, %v309, 0
        %v344 = vsel %vm324, %v310, 0
        %v347 = vsel %vm324, %v311, 0
        %349 = vmatpush.bf16.msra.mxu0 0
        %350 = vmatpush.bf16.msra.mxu0 0
        %351 = vmatpush.bf16.msra.mxu0 0
        %352 = vmatpush.bf16.msra.mxu0 0
        %353 = vmatpush.bf16.msra.mxu0 0
        %354 = vmatpush.bf16.msra.mxu0 0
        %355 = vmatpush.bf16.msra.mxu0 %v321
        %356 = vmatpush.bf16.msra.mxu0 %v320
        %357 = vmatmul.bf16.gmra.mxu0 %v326
        %v358 = vpop.f32.mrf.mxu0
        %v359 = vadd.f32 0.0, %v358
        %v360 = vpop.f32.mrf.mxu0
        %v361 = vadd.f32 0.0, %v360
        %362 = vmatmul.bf16.gmra.mxu0 %v329
        %v363 = vpop.f32.mrf.mxu0
        %v364 = vadd.f32 0.0, %v363
        %v365 = vpop.f32.mrf.mxu0
        %v366 = vadd.f32 0.0, %v365
        %367 = vmatmul.bf16.gmra.mxu0 %v332
        %v368 = vpop.f32.mrf.mxu0
        %v369 = vadd.f32 0.0, %v368
        %v370 = vpop.f32.mrf.mxu0
        %v371 = vadd.f32 0.0, %v370
        %372 = vmatmul.bf16.gmra.mxu0 %v335
        %v373 = vpop.f32.mrf.mxu0
        %v374 = vadd.f32 0.0, %v373
        %v375 = vpop.f32.mrf.mxu0
        %v376 = vadd.f32 0.0, %v375
        %377 = vmatmul.bf16.gmra.mxu0 %v338
        %v378 = vpop.f32.mrf.mxu0
        %v379 = vadd.f32 0.0, %v378
        %v380 = vpop.f32.mrf.mxu0
        %v381 = vadd.f32 0.0, %v380
        %382 = vmatmul.bf16.gmra.mxu0 %v341
        %v383 = vpop.f32.mrf.mxu0
        %v384 = vadd.f32 0.0, %v383
        %v385 = vpop.f32.mrf.mxu0
        %v386 = vadd.f32 0.0, %v385
        %387 = vmatmul.bf16.gmra.mxu0 %v344
        %v388 = vpop.f32.mrf.mxu0
        %v389 = vadd.f32 0.0, %v388
        %v390 = vpop.f32.mrf.mxu0
        %v391 = vadd.f32 0.0, %v390
        %392 = vmatmul.bf16.gmra.mxu0 %v347
        %v393 = vpop.f32.mrf.mxu0
        %v394 = vadd.f32 0.0, %v393
        %v395 = vpop.f32.mrf.mxu0
        %v396 = vadd.f32 0.0, %v395
        %397 = vdwg.mxu0
        %v414 = vrot.slane %v359, 4
        %v415 = vrot.slane %v361, 4
        %v416 = vrot.slane %v364, 4
        %v417 = vrot.slane %v366, 4
        %v418 = vrot.slane %v369, 4
        %v419 = vrot.slane %v371, 4
        %v420 = vrot.slane %v374, 4
        %v421 = vrot.slane %v376, 4
        %v422 = vrot.slane %v379, 4
        %v423 = vrot.slane %v381, 4
        %v424 = vrot.slane %v384, 4
        %v425 = vrot.slane %v386, 4
        %v426 = vrot.slane %v389, 4
        %v427 = vrot.slane %v391, 4
        %v428 = vrot.slane %v394, 4
        %v429 = vrot.slane %v396, 4
        %v447 = vperm.slane %v251, 0
        %v448 = vrot.slane %v447, 4
        %v449 = vrot.slane %v447, 1
        %v450 = vrot.slane %v447, 2
        %v451 = vrot.slane %v447, 3
        %v452 = vrot.slane %v448, 1
        %v453 = vrot.slane %v448, 2
        %v454 = vrot.slane %v448, 3
        %v463 = vadd.f32 %v359, %v447
        %v464 = vadd.f32 %v414, %v449
        %v465 = vadd.f32 %v361, %v450
        %v466 = vadd.f32 %v415, %v451
        %v467 = vadd.f32 %v364, %v448
        %v468 = vadd.f32 %v416, %v452
        %v469 = vadd.f32 %v366, %v453
        %v470 = vadd.f32 %v417, %v454
        %v471 = vadd.f32 %v369, %v447
        %v472 = vadd.f32 %v418, %v449
        %v473 = vadd.f32 %v371, %v450
        %v474 = vadd.f32 %v419, %v451
        %v475 = vadd.f32 %v374, %v448
        %v476 = vadd.f32 %v420, %v452
        %v477 = vadd.f32 %v376, %v453
        %v478 = vadd.f32 %v421, %v454
        %v479 = vadd.f32 %v379, %v447
        %v480 = vadd.f32 %v422, %v449
        %v481 = vadd.f32 %v381, %v450
        %v482 = vadd.f32 %v423, %v451
        %v483 = vadd.f32 %v384, %v448
        %v484 = vadd.f32 %v424, %v452
        %v485 = vadd.f32 %v386, %v453
        %v486 = vadd.f32 %v425, %v454
        %v487 = vadd.f32 %v389, %v447
        %v488 = vadd.f32 %v426, %v449
        %v489 = vadd.f32 %v391, %v450
        %v490 = vadd.f32 %v427, %v451
        %v491 = vadd.f32 %v394, %v448
        %v492 = vadd.f32 %v428, %v452
        %v493 = vadd.f32 %v396, %v453
        %v494 = vadd.f32 %v429, %v454
        %vm495 = vcmp.gt.f32.partialorder %v463, 0.0
        %vm496 = vcmp.gt.f32.partialorder %v464, 0.0
        %vm497 = vcmp.gt.f32.partialorder %v465, 0.0
        %vm498 = vcmp.gt.f32.partialorder %v466, 0.0
        %vm499 = vcmp.gt.f32.partialorder %v467, 0.0
        %vm500 = vcmp.gt.f32.partialorder %v468, 0.0
        %vm501 = vcmp.gt.f32.partialorder %v469, 0.0
        %vm502 = vcmp.gt.f32.partialorder %v470, 0.0
        %vm503 = vcmp.gt.f32.partialorder %v471, 0.0
        %vm504 = vcmp.gt.f32.partialorder %v472, 0.0
        %vm505 = vcmp.gt.f32.partialorder %v473, 0.0
        %vm506 = vcmp.gt.f32.partialorder %v474, 0.0
        %vm507 = vcmp.gt.f32.partialorder %v475, 0.0
        %vm508 = vcmp.gt.f32.partialorder %v476, 0.0
        %vm509 = vcmp.gt.f32.partialorder %v477, 0.0
        %vm510 = vcmp.gt.f32.partialorder %v478, 0.0
        %vm511 = vcmp.gt.f32.partialorder %v479, 0.0
        %vm512 = vcmp.gt.f32.partialorder %v480, 0.0
        %vm513 = vcmp.gt.f32.partialorder %v481, 0.0
        %vm514 = vcmp.gt.f32.partialorder %v482, 0.0
        %vm515 = vcmp.gt.f32.partialorder %v483, 0.0
        %vm516 = vcmp.gt.f32.partialorder %v484, 0.0
        %vm517 = vcmp.gt.f32.partialorder %v485, 0.0
        %vm518 = vcmp.gt.f32.partialorder %v486, 0.0
        %vm519 = vcmp.gt.f32.partialorder %v487, 0.0
        %vm520 = vcmp.gt.f32.partialorder %v488, 0.0
        %vm521 = vcmp.gt.f32.partialorder %v489, 0.0
        %vm522 = vcmp.gt.f32.partialorder %v490, 0.0
        %vm523 = vcmp.gt.f32.partialorder %v491, 0.0
        %vm524 = vcmp.gt.f32.partialorder %v492, 0.0
        %vm525 = vcmp.gt.f32.partialorder %v493, 0.0
        %vm526 = vcmp.gt.f32.partialorder %v494, 0.0
        %v527 = vstv %s250
        %v528 = vmul.f32 %v527, %v463
        %v529 = vmul.f32 %v527, %v464
        %v530 = vmul.f32 %v527, %v465
        %v531 = vmul.f32 %v527, %v466
        %v532 = vmul.f32 %v527, %v467
        %v533 = vmul.f32 %v527, %v468
        %v534 = vmul.f32 %v527, %v469
        %v535 = vmul.f32 %v527, %v470
        %v536 = vmul.f32 %v527, %v471
        %v537 = vmul.f32 %v527, %v472
        %v538 = vmul.f32 %v527, %v473
        %v539 = vmul.f32 %v527, %v474
        %v540 = vmul.f32 %v527, %v475
        %v541 = vmul.f32 %v527, %v476
        %v542 = vmul.f32 %v527, %v477
        %v543 = vmul.f32 %v527, %v478
        %v544 = vmul.f32 %v527, %v479
        %v545 = vmul.f32 %v527, %v480
        %v546 = vmul.f32 %v527, %v481
        %v547 = vmul.f32 %v527, %v482
        %v548 = vmul.f32 %v527, %v483
        %v549 = vmul.f32 %v527, %v484
        %v550 = vmul.f32 %v527, %v485
        %v551 = vmul.f32 %v527, %v486
        %v552 = vmul.f32 %v527, %v487
        %v553 = vmul.f32 %v527, %v488
        %v554 = vmul.f32 %v527, %v489
        %v555 = vmul.f32 %v527, %v490
        %v556 = vmul.f32 %v527, %v491
        %v557 = vmul.f32 %v527, %v492
        %v558 = vmul.f32 %v527, %v493
        %v559 = vmul.f32 %v527, %v494
        %v560 = vsel %vm495, %v463, %v528
        %v561 = vsel %vm496, %v464, %v529
        %v562 = vsel %vm497, %v465, %v530
        %v563 = vsel %vm498, %v466, %v531
        %v564 = vsel %vm499, %v467, %v532
        %v565 = vsel %vm500, %v468, %v533
        %v566 = vsel %vm501, %v469, %v534
        %v567 = vsel %vm502, %v470, %v535
        %v568 = vsel %vm503, %v471, %v536
        %v569 = vsel %vm504, %v472, %v537
        %v570 = vsel %vm505, %v473, %v538
        %v571 = vsel %vm506, %v474, %v539
        %v572 = vsel %vm507, %v475, %v540
        %v573 = vsel %vm508, %v476, %v541
        %v574 = vsel %vm509, %v477, %v542
        %v575 = vsel %vm510, %v478, %v543
        %v576 = vsel %vm511, %v479, %v544
        %v577 = vsel %vm512, %v480, %v545
        %v578 = vsel %vm513, %v481, %v546
        %v579 = vsel %vm514, %v482, %v547
        %v580 = vsel %vm515, %v483, %v548
        %v581 = vsel %vm516, %v484, %v549
        %v582 = vsel %vm517, %v485, %v550
        %v583 = vsel %vm518, %v486, %v551
        %v584 = vsel %vm519, %v487, %v552
        %v585 = vsel %vm520, %v488, %v553
        %v586 = vsel %vm521, %v489, %v554
        %v587 = vsel %vm522, %v490, %v555
        %v588 = vsel %vm523, %v491, %v556
        %v589 = vsel %vm524, %v492, %v557
        %v590 = vsel %vm525, %v493, %v558
        %v591 = vsel %vm526, %v494, %v559
        %v592 = vlaneseq
        %v593 = vshrl.u32 %v592, 7
        %vm594 = vcmp.ne.s32.totalorder %v593, 0
        %v595 = vsel %vm594, 1, 0
        %vm596 = vcmp.eq.s32.totalorder %v595, 1
        %v597 = vsel %vm596, %v359, 0.0
        %v598 = vsel %vm596, %v414, 0.0
        %v599 = vsel %vm596, %v361, 0.0
        %v600 = vsel %vm596, %v415, 0.0
        %v601 = vsel %vm596, %v364, 0.0
        %v602 = vsel %vm596, %v416, 0.0
        %v603 = vsel %vm596, %v366, 0.0
        %v604 = vsel %vm596, %v417, 0.0
        %v605 = vsel %vm596, %v369, 0.0
        %v606 = vsel %vm596, %v418, 0.0
        %v607 = vsel %vm596, %v371, 0.0
        %v608 = vsel %vm596, %v419, 0.0
        %v609 = vsel %vm596, %v374, 0.0
        %v610 = vsel %vm596, %v420, 0.0
        %v611 = vsel %vm596, %v376, 0.0
        %v612 = vsel %vm596, %v421, 0.0
        %v613 = vsel %vm596, %v379, 0.0
        %v614 = vsel %vm596, %v422, 0.0
        %v615 = vsel %vm596, %v381, 0.0
        %v616 = vsel %vm596, %v423, 0.0
        %v617 = vsel %vm596, %v384, 0.0
        %v618 = vsel %vm596, %v424, 0.0
        %v619 = vsel %vm596, %v386, 0.0
        %v620 = vsel %vm596, %v425, 0.0
        %v621 = vsel %vm596, %v389, 0.0
        %v622 = vsel %vm596, %v426, 0.0
        %v623 = vsel %vm596, %v391, 0.0
        %v624 = vsel %vm596, %v427, 0.0
        %v625 = vsel %vm596, %v394, 0.0
        %v626 = vsel %vm596, %v428, 0.0
        %v627 = vsel %vm596, %v396, 0.0
        %v628 = vsel %vm596, %v429, 0.0
        %v629 = vld [vmem:[%s246] sm:$0x3]
        %v630 = vld [vmem:[%s246 + $0x2] sm:$0x3]
        %v631 = vld [vmem:[%s246 + $0x4] sm:$0x3]
        %v632 = vld [vmem:[%s246 + $0x6] sm:$0x3]
        %v633 = vld [vmem:[%s246 + $0x8] sm:$0x3]
        %v634 = vld [vmem:[%s246 + $0xa] sm:$0x3]
        %v635 = vld [vmem:[%s246 + $0xc] sm:$0x3]
        %v636 = vld [vmem:[%s246 + $0xe] sm:$0x3]
        %v637 = vld [vmem:[%s246 + $0x10] sm:$0x3]
        %v638 = vld [vmem:[%s246 + $0x12] sm:$0x3]
        %v639 = vld [vmem:[%s246 + $0x14] sm:$0x3]
        %v640 = vld [vmem:[%s246 + $0x16] sm:$0x3]
        %v641 = vld [vmem:[%s246 + $0x18] sm:$0x3]
        %v642 = vld [vmem:[%s246 + $0x1a] sm:$0x3]
        %v643 = vld [vmem:[%s246 + $0x1c] sm:$0x3]
        %v644 = vld [vmem:[%s246 + $0x1e] sm:$0x3]
        %v645 = vld [vmem:[%s246 + $0x20] sm:$0x3]
        %v646 = vld [vmem:[%s246 + $0x22] sm:$0x3]
        %v647 = vld [vmem:[%s246 + $0x24] sm:$0x3]
        %v648 = vld [vmem:[%s246 + $0x26] sm:$0x3]
        %v649 = vld [vmem:[%s246 + $0x28] sm:$0x3]
        %v650 = vld [vmem:[%s246 + $0x2a] sm:$0x3]
        %v651 = vld [vmem:[%s246 + $0x2c] sm:$0x3]
        %v652 = vld [vmem:[%s246 + $0x2e] sm:$0x3]
        %v653 = vld [vmem:[%s246 + $0x30] sm:$0x3]
        %v654 = vld [vmem:[%s246 + $0x32] sm:$0x3]
        %v655 = vld [vmem:[%s246 + $0x34] sm:$0x3]
        %v656 = vld [vmem:[%s246 + $0x36] sm:$0x3]
        %v657 = vld [vmem:[%s246 + $0x38] sm:$0x3]
        %v658 = vld [vmem:[%s246 + $0x3a] sm:$0x3]
        %v659 = vld [vmem:[%s246 + $0x3c] sm:$0x3]
        %v660 = vld [vmem:[%s246 + $0x3e] sm:$0x3]
        %v661 = vunpack.c.l.bf16 %v629
        %v662 = vunpack.c.l.bf16 %v630
        %v663 = vunpack.c.l.bf16 %v631
        %v664 = vunpack.c.l.bf16 %v632
        %v665 = vunpack.c.l.bf16 %v633
        %v666 = vunpack.c.l.bf16 %v634
        %v667 = vunpack.c.l.bf16 %v635
        %v668 = vunpack.c.l.bf16 %v636
        %v669 = vunpack.c.l.bf16 %v637
        %v670 = vunpack.c.l.bf16 %v638
        %v671 = vunpack.c.l.bf16 %v639
        %v672 = vunpack.c.l.bf16 %v640
        %v673 = vunpack.c.l.bf16 %v641
        %v674 = vunpack.c.l.bf16 %v642
        %v675 = vunpack.c.l.bf16 %v643
        %v676 = vunpack.c.l.bf16 %v644
        %v677 = vunpack.c.l.bf16 %v645
        %v678 = vunpack.c.l.bf16 %v646
        %v679 = vunpack.c.l.bf16 %v647
        %v680 = vunpack.c.l.bf16 %v648
        %v681 = vunpack.c.l.bf16 %v649
        %v682 = vunpack.c.l.bf16 %v650
        %v683 = vunpack.c.l.bf16 %v651
        %v684 = vunpack.c.l.bf16 %v652
        %v685 = vunpack.c.l.bf16 %v653
        %v686 = vunpack.c.l.bf16 %v654
        %v687 = vunpack.c.l.bf16 %v655
        %v688 = vunpack.c.l.bf16 %v656
        %v689 = vunpack.c.l.bf16 %v657
        %v690 = vunpack.c.l.bf16 %v658
        %v691 = vunpack.c.l.bf16 %v659
        %v692 = vunpack.c.l.bf16 %v660
        %694 = vset.pattern.permute.xlu0 0
        %695 = vperm.xlu0 %694, %v661
        %v696 = vpop.permute.xlu0 %695
        %v699 = vunpack.c.l.s4 839922192
        %v700 = vunpack.c.0.s8 %v699
        %v701 = vperm.slane %v696, %v700
        %703 = vset.pattern.permute.xlu0 0
        %704 = vperm.xlu0 %703, %v662
        %v705 = vpop.permute.xlu0 %704
        %v708 = vunpack.c.l.s4 839922192
        %v709 = vunpack.c.0.s8 %v708
        %v710 = vperm.slane %v705, %v709
        %712 = vset.pattern.permute.xlu0 0
        %713 = vperm.xlu0 %712, %v663
        %v714 = vpop.permute.xlu0 %713
        %v717 = vunpack.c.l.s4 839922192
        %v718 = vunpack.c.0.s8 %v717
        %v719 = vperm.slane %v714, %v718
        %721 = vset.pattern.permute.xlu0 0
        %722 = vperm.xlu0 %721, %v664
        %v723 = vpop.permute.xlu0 %722
        %v726 = vunpack.c.l.s4 839922192
        %v727 = vunpack.c.0.s8 %v726
        %v728 = vperm.slane %v723, %v727
        %730 = vset.pattern.permute.xlu0 0
        %731 = vperm.xlu0 %730, %v665
        %v732 = vpop.permute.xlu0 %731
        %v735 = vunpack.c.l.s4 839922192
        %v736 = vunpack.c.0.s8 %v735
        %v737 = vperm.slane %v732, %v736
        %739 = vset.pattern.permute.xlu0 0
        %740 = vperm.xlu0 %739, %v666
        %v741 = vpop.permute.xlu0 %740
        %v744 = vunpack.c.l.s4 839922192
        %v745 = vunpack.c.0.s8 %v744
        %v746 = vperm.slane %v741, %v745
        %748 = vset.pattern.permute.xlu0 0
        %749 = vperm.xlu0 %748, %v667
        %v750 = vpop.permute.xlu0 %749
        %v753 = vunpack.c.l.s4 839922192
        %v754 = vunpack.c.0.s8 %v753
        %v755 = vperm.slane %v750, %v754
        %757 = vset.pattern.permute.xlu0 0
        %758 = vperm.xlu0 %757, %v668
        %v759 = vpop.permute.xlu0 %758
        %v762 = vunpack.c.l.s4 839922192
        %v763 = vunpack.c.0.s8 %v762
        %v764 = vperm.slane %v759, %v763
        %766 = vset.pattern.permute.xlu0 0
        %767 = vperm.xlu0 %766, %v669
        %v768 = vpop.permute.xlu0 %767
        %v771 = vunpack.c.l.s4 839922192
        %v772 = vunpack.c.0.s8 %v771
        %v773 = vperm.slane %v768, %v772
        %775 = vset.pattern.permute.xlu0 0
        %776 = vperm.xlu0 %775, %v670
        %v777 = vpop.permute.xlu0 %776
        %v780 = vunpack.c.l.s4 839922192
        %v781 = vunpack.c.0.s8 %v780
        %v782 = vperm.slane %v777, %v781
        %784 = vset.pattern.permute.xlu0 0
        %785 = vperm.xlu0 %784, %v671
        %v786 = vpop.permute.xlu0 %785
        %v789 = vunpack.c.l.s4 839922192
        %v790 = vunpack.c.0.s8 %v789
        %v791 = vperm.slane %v786, %v790
        %793 = vset.pattern.permute.xlu0 0
        %794 = vperm.xlu0 %793, %v672
        %v795 = vpop.permute.xlu0 %794
        %v798 = vunpack.c.l.s4 839922192
        %v799 = vunpack.c.0.s8 %v798
        %v800 = vperm.slane %v795, %v799
        %802 = vset.pattern.permute.xlu0 0
        %803 = vperm.xlu0 %802, %v673
        %v804 = vpop.permute.xlu0 %803
        %v807 = vunpack.c.l.s4 839922192
        %v808 = vunpack.c.0.s8 %v807
        %v809 = vperm.slane %v804, %v808
        %811 = vset.pattern.permute.xlu0 0
        %812 = vperm.xlu0 %811, %v674
        %v813 = vpop.permute.xlu0 %812
        %v816 = vunpack.c.l.s4 839922192
        %v817 = vunpack.c.0.s8 %v816
        %v818 = vperm.slane %v813, %v817
        %820 = vset.pattern.permute.xlu0 0
        %821 = vperm.xlu0 %820, %v675
        %v822 = vpop.permute.xlu0 %821
        %v825 = vunpack.c.l.s4 839922192
        %v826 = vunpack.c.0.s8 %v825
        %v827 = vperm.slane %v822, %v826
        %829 = vset.pattern.permute.xlu0 0
        %830 = vperm.xlu0 %829, %v676
        %v831 = vpop.permute.xlu0 %830
        %v834 = vunpack.c.l.s4 839922192
        %v835 = vunpack.c.0.s8 %v834
        %v836 = vperm.slane %v831, %v835
        %838 = vset.pattern.permute.xlu0 0
        %839 = vperm.xlu0 %838, %v677
        %v840 = vpop.permute.xlu0 %839
        %v843 = vunpack.c.l.s4 839922192
        %v844 = vunpack.c.0.s8 %v843
        %v845 = vperm.slane %v840, %v844
        %847 = vset.pattern.permute.xlu0 0
        %848 = vperm.xlu0 %847, %v678
        %v849 = vpop.permute.xlu0 %848
        %v852 = vunpack.c.l.s4 839922192
        %v853 = vunpack.c.0.s8 %v852
        %v854 = vperm.slane %v849, %v853
        %856 = vset.pattern.permute.xlu0 0
        %857 = vperm.xlu0 %856, %v679
        %v858 = vpop.permute.xlu0 %857
        %v861 = vunpack.c.l.s4 839922192
        %v862 = vunpack.c.0.s8 %v861
        %v863 = vperm.slane %v858, %v862
        %865 = vset.pattern.permute.xlu0 0
        %866 = vperm.xlu0 %865, %v680
        %v867 = vpop.permute.xlu0 %866
        %v870 = vunpack.c.l.s4 839922192
        %v871 = vunpack.c.0.s8 %v870
        %v872 = vperm.slane %v867, %v871
        %874 = vset.pattern.permute.xlu0 0
        %875 = vperm.xlu0 %874, %v681
        %v876 = vpop.permute.xlu0 %875
        %v879 = vunpack.c.l.s4 839922192
        %v880 = vunpack.c.0.s8 %v879
        %v881 = vperm.slane %v876, %v880
        %883 = vset.pattern.permute.xlu0 0
        %884 = vperm.xlu0 %883, %v682
        %v885 = vpop.permute.xlu0 %884
        %v888 = vunpack.c.l.s4 839922192
        %v889 = vunpack.c.0.s8 %v888
        %v890 = vperm.slane %v885, %v889
        %892 = vset.pattern.permute.xlu0 0
        %893 = vperm.xlu0 %892, %v683
        %v894 = vpop.permute.xlu0 %893
        %v897 = vunpack.c.l.s4 839922192
        %v898 = vunpack.c.0.s8 %v897
        %v899 = vperm.slane %v894, %v898
        %901 = vset.pattern.permute.xlu0 0
        %902 = vperm.xlu0 %901, %v684
        %v903 = vpop.permute.xlu0 %902
        %v906 = vunpack.c.l.s4 839922192
        %v907 = vunpack.c.0.s8 %v906
        %v908 = vperm.slane %v903, %v907
        %910 = vset.pattern.permute.xlu0 0
        %911 = vperm.xlu0 %910, %v685
        %v912 = vpop.permute.xlu0 %911
        %v915 = vunpack.c.l.s4 839922192
        %v916 = vunpack.c.0.s8 %v915
        %v917 = vperm.slane %v912, %v916
        %919 = vset.pattern.permute.xlu0 0
        %920 = vperm.xlu0 %919, %v686
        %v921 = vpop.permute.xlu0 %920
        %v924 = vunpack.c.l.s4 839922192
        %v925 = vunpack.c.0.s8 %v924
        %v926 = vperm.slane %v921, %v925
        %928 = vset.pattern.permute.xlu0 0
        %929 = vperm.xlu0 %928, %v687
        %v930 = vpop.permute.xlu0 %929
        %v933 = vunpack.c.l.s4 839922192
        %v934 = vunpack.c.0.s8 %v933
        %v935 = vperm.slane %v930, %v934
        %937 = vset.pattern.permute.xlu0 0
        %938 = vperm.xlu0 %937, %v688
        %v939 = vpop.permute.xlu0 %938
        %v942 = vunpack.c.l.s4 839922192
        %v943 = vunpack.c.0.s8 %v942
        %v944 = vperm.slane %v939, %v943
        %946 = vset.pattern.permute.xlu0 0
        %947 = vperm.xlu0 %946, %v689
        %v948 = vpop.permute.xlu0 %947
        %v951 = vunpack.c.l.s4 839922192
        %v952 = vunpack.c.0.s8 %v951
        %v953 = vperm.slane %v948, %v952
        %955 = vset.pattern.permute.xlu0 0
        %956 = vperm.xlu0 %955, %v690
        %v957 = vpop.permute.xlu0 %956
        %v960 = vunpack.c.l.s4 839922192
        %v961 = vunpack.c.0.s8 %v960
        %v962 = vperm.slane %v957, %v961
        %964 = vset.pattern.permute.xlu0 0
        %965 = vperm.xlu0 %964, %v691
        %v966 = vpop.permute.xlu0 %965
        %v969 = vunpack.c.l.s4 839922192
        %v970 = vunpack.c.0.s8 %v969
        %v971 = vperm.slane %v966, %v970
        %973 = vset.pattern.permute.xlu0 0
        %974 = vperm.xlu0 %973, %v692
        %v975 = vpop.permute.xlu0 %974
        %v978 = vunpack.c.l.s4 839922192
        %v979 = vunpack.c.0.s8 %v978
        %v980 = vperm.slane %v975, %v979
        %v981 = vperm.slane %v597, 0
        %v982 = vperm.slane %v598, 0
        %v983 = vperm.slane %v599, 0
        %v984 = vperm.slane %v600, 0
        %v985 = vperm.slane %v601, 0
        %v986 = vperm.slane %v602, 0
        %v987 = vperm.slane %v603, 0
        %v988 = vperm.slane %v604, 0
        %v989 = vperm.slane %v605, 0
        %v990 = vperm.slane %v606, 0
        %v991 = vperm.slane %v607, 0
        %v992 = vperm.slane %v608, 0
        %v993 = vperm.slane %v609, 0
        %v994 = vperm.slane %v610, 0
        %v995 = vperm.slane %v611, 0
        %v996 = vperm.slane %v612, 0
        %v997 = vperm.slane %v613, 0
        %v998 = vperm.slane %v614, 0
        %v999 = vperm.slane %v615, 0
        %v1000 = vperm.slane %v616, 0
        %v1001 = vperm.slane %v617, 0
        %v1002 = vperm.slane %v618, 0
        %v1003 = vperm.slane %v619, 0
        %v1004 = vperm.slane %v620, 0
        %v1005 = vperm.slane %v621, 0
        %v1006 = vperm.slane %v622, 0
        %v1007 = vperm.slane %v623, 0
        %v1008 = vperm.slane %v624, 0
        %v1009 = vperm.slane %v625, 0
        %v1010 = vperm.slane %v626, 0
        %v1011 = vperm.slane %v627, 0
        %v1012 = vperm.slane %v628, 0
        %v1013 = vmul.f32 %v701, %v981
        %v1014 = vmul.f32 %v710, %v982
        %v1015 = vmul.f32 %v719, %v983
        %v1016 = vmul.f32 %v728, %v984
        %v1017 = vmul.f32 %v737, %v985
        %v1018 = vmul.f32 %v746, %v986
        %v1019 = vmul.f32 %v755, %v987
        %v1020 = vmul.f32 %v764, %v988
        %v1021 = vmul.f32 %v773, %v989
        %v1022 = vmul.f32 %v782, %v990
        %v1023 = vmul.f32 %v791, %v991
        %v1024 = vmul.f32 %v800, %v992
        %v1025 = vmul.f32 %v809, %v993
        %v1026 = vmul.f32 %v818, %v994
        %v1027 = vmul.f32 %v827, %v995
        %v1028 = vmul.f32 %v836, %v996
        %v1029 = vmul.f32 %v845, %v997
        %v1030 = vmul.f32 %v854, %v998
        %v1031 = vmul.f32 %v863, %v999
        %v1032 = vmul.f32 %v872, %v1000
        %v1033 = vmul.f32 %v881, %v1001
        %v1034 = vmul.f32 %v890, %v1002
        %v1035 = vmul.f32 %v899, %v1003
        %v1036 = vmul.f32 %v908, %v1004
        %v1037 = vmul.f32 %v917, %v1005
        %v1038 = vmul.f32 %v926, %v1006
        %v1039 = vmul.f32 %v935, %v1007
        %v1040 = vmul.f32 %v944, %v1008
        %v1041 = vmul.f32 %v953, %v1009
        %v1042 = vmul.f32 %v962, %v1010
        %v1043 = vmul.f32 %v971, %v1011
        %v1044 = vmul.f32 %v980, %v1012
        %1045 = vset.pattern.permute.xlu0 1
        %1046 = vperm.xlu0 %1045, %v661
        %v1047 = vpop.permute.xlu0 %1046
        %v1050 = vunpack.c.l.s4 839922192
        %v1051 = vunpack.c.0.s8 %v1050
        %v1052 = vperm.slane %v1047, %v1051
        %1053 = vset.pattern.permute.xlu0 1
        %1054 = vperm.xlu0 %1053, %v662
        %v1055 = vpop.permute.xlu0 %1054
        %v1058 = vunpack.c.l.s4 839922192
        %v1059 = vunpack.c.0.s8 %v1058
        %v1060 = vperm.slane %v1055, %v1059
        %1061 = vset.pattern.permute.xlu0 1
        %1062 = vperm.xlu0 %1061, %v663
        %v1063 = vpop.permute.xlu0 %1062
        %v1066 = vunpack.c.l.s4 839922192
        %v1067 = vunpack.c.0.s8 %v1066
        %v1068 = vperm.slane %v1063, %v1067
        %1069 = vset.pattern.permute.xlu0 1
        %1070 = vperm.xlu0 %1069, %v664
        %v1071 = vpop.permute.xlu0 %1070
        %v1074 = vunpack.c.l.s4 839922192
        %v1075 = vunpack.c.0.s8 %v1074
        %v1076 = vperm.slane %v1071, %v1075
        %1077 = vset.pattern.permute.xlu0 1
        %1078 = vperm.xlu0 %1077, %v665
        %v1079 = vpop.permute.xlu0 %1078
        %v1082 = vunpack.c.l.s4 839922192
        %v1083 = vunpack.c.0.s8 %v1082
        %v1084 = vperm.slane %v1079, %v1083
        %1085 = vset.pattern.permute.xlu0 1
        %1086 = vperm.xlu0 %1085, %v666
        %v1087 = vpop.permute.xlu0 %1086
        %v1090 = vunpack.c.l.s4 839922192
        %v1091 = vunpack.c.0.s8 %v1090
        %v1092 = vperm.slane %v1087, %v1091
        %1093 = vset.pattern.permute.xlu0 1
        %1094 = vperm.xlu0 %1093, %v667
        %v1095 = vpop.permute.xlu0 %1094
        %v1098 = vunpack.c.l.s4 839922192
        %v1099 = vunpack.c.0.s8 %v1098
        %v1100 = vperm.slane %v1095, %v1099
        %1101 = vset.pattern.permute.xlu0 1
        %1102 = vperm.xlu0 %1101, %v668
        %v1103 = vpop.permute.xlu0 %1102
        %v1106 = vunpack.c.l.s4 839922192
        %v1107 = vunpack.c.0.s8 %v1106
        %v1108 = vperm.slane %v1103, %v1107
        %1109 = vset.pattern.permute.xlu0 1
        %1110 = vperm.xlu0 %1109, %v669
        %v1111 = vpop.permute.xlu0 %1110
        %v1114 = vunpack.c.l.s4 839922192
        %v1115 = vunpack.c.0.s8 %v1114
        %v1116 = vperm.slane %v1111, %v1115
        %1117 = vset.pattern.permute.xlu0 1
        %1118 = vperm.xlu0 %1117, %v670
        %v1119 = vpop.permute.xlu0 %1118
        %v1122 = vunpack.c.l.s4 839922192
        %v1123 = vunpack.c.0.s8 %v1122
        %v1124 = vperm.slane %v1119, %v1123
        %1125 = vset.pattern.permute.xlu0 1
        %1126 = vperm.xlu0 %1125, %v671
        %v1127 = vpop.permute.xlu0 %1126
        %v1130 = vunpack.c.l.s4 839922192
        %v1131 = vunpack.c.0.s8 %v1130
        %v1132 = vperm.slane %v1127, %v1131
        %1133 = vset.pattern.permute.xlu0 1
        %1134 = vperm.xlu0 %1133, %v672
        %v1135 = vpop.permute.xlu0 %1134
        %v1138 = vunpack.c.l.s4 839922192
        %v1139 = vunpack.c.0.s8 %v1138
        %v1140 = vperm.slane %v1135, %v1139
        %1141 = vset.pattern.permute.xlu0 1
        %1142 = vperm.xlu0 %1141, %v673
        %v1143 = vpop.permute.xlu0 %1142
        %v1146 = vunpack.c.l.s4 839922192
        %v1147 = vunpack.c.0.s8 %v1146
        %v1148 = vperm.slane %v1143, %v1147
        %1149 = vset.pattern.permute.xlu0 1
        %1150 = vperm.xlu0 %1149, %v674
        %v1151 = vpop.permute.xlu0 %1150
        %v1154 = vunpack.c.l.s4 839922192
        %v1155 = vunpack.c.0.s8 %v1154
        %v1156 = vperm.slane %v1151, %v1155
        %1157 = vset.pattern.permute.xlu0 1
        %1158 = vperm.xlu0 %1157, %v675
        %v1159 = vpop.permute.xlu0 %1158
        %v1162 = vunpack.c.l.s4 839922192
        %v1163 = vunpack.c.0.s8 %v1162
        %v1164 = vperm.slane %v1159, %v1163
        %1165 = vset.pattern.permute.xlu0 1
        %1166 = vperm.xlu0 %1165, %v676
        %v1167 = vpop.permute.xlu0 %1166
        %v1170 = vunpack.c.l.s4 839922192
        %v1171 = vunpack.c.0.s8 %v1170
        %v1172 = vperm.slane %v1167, %v1171
        %1173 = vset.pattern.permute.xlu0 1
        %1174 = vperm.xlu0 %1173, %v677
        %v1175 = vpop.permute.xlu0 %1174
        %v1178 = vunpack.c.l.s4 839922192
        %v1179 = vunpack.c.0.s8 %v1178
        %v1180 = vperm.slane %v1175, %v1179
        %1181 = vset.pattern.permute.xlu0 1
        %1182 = vperm.xlu0 %1181, %v678
        %v1183 = vpop.permute.xlu0 %1182
        %v1186 = vunpack.c.l.s4 839922192
        %v1187 = vunpack.c.0.s8 %v1186
        %v1188 = vperm.slane %v1183, %v1187
        %1189 = vset.pattern.permute.xlu0 1
        %1190 = vperm.xlu0 %1189, %v679
        %v1191 = vpop.permute.xlu0 %1190
        %v1194 = vunpack.c.l.s4 839922192
        %v1195 = vunpack.c.0.s8 %v1194
        %v1196 = vperm.slane %v1191, %v1195
        %1197 = vset.pattern.permute.xlu0 1
        %1198 = vperm.xlu0 %1197, %v680
        %v1199 = vpop.permute.xlu0 %1198
        %v1202 = vunpack.c.l.s4 839922192
        %v1203 = vunpack.c.0.s8 %v1202
        %v1204 = vperm.slane %v1199, %v1203
        %1205 = vset.pattern.permute.xlu0 1
        %1206 = vperm.xlu0 %1205, %v681
        %v1207 = vpop.permute.xlu0 %1206
        %v1210 = vunpack.c.l.s4 839922192
        %v1211 = vunpack.c.0.s8 %v1210
        %v1212 = vperm.slane %v1207, %v1211
        %1213 = vset.pattern.permute.xlu0 1
        %1214 = vperm.xlu0 %1213, %v682
        %v1215 = vpop.permute.xlu0 %1214
        %v1218 = vunpack.c.l.s4 839922192
        %v1219 = vunpack.c.0.s8 %v1218
        %v1220 = vperm.slane %v1215, %v1219
        %1221 = vset.pattern.permute.xlu0 1
        %1222 = vperm.xlu0 %1221, %v683
        %v1223 = vpop.permute.xlu0 %1222
        %v1226 = vunpack.c.l.s4 839922192
        %v1227 = vunpack.c.0.s8 %v1226
        %v1228 = vperm.slane %v1223, %v1227
        %1229 = vset.pattern.permute.xlu0 1
        %1230 = vperm.xlu0 %1229, %v684
        %v1231 = vpop.permute.xlu0 %1230
        %v1234 = vunpack.c.l.s4 839922192
        %v1235 = vunpack.c.0.s8 %v1234
        %v1236 = vperm.slane %v1231, %v1235
        %1237 = vset.pattern.permute.xlu0 1
        %1238 = vperm.xlu0 %1237, %v685
        %v1239 = vpop.permute.xlu0 %1238
        %v1242 = vunpack.c.l.s4 839922192
        %v1243 = vunpack.c.0.s8 %v1242
        %v1244 = vperm.slane %v1239, %v1243
        %1245 = vset.pattern.permute.xlu0 1
        %1246 = vperm.xlu0 %1245, %v686
        %v1247 = vpop.permute.xlu0 %1246
        %v1250 = vunpack.c.l.s4 839922192
        %v1251 = vunpack.c.0.s8 %v1250
        %v1252 = vperm.slane %v1247, %v1251
        %1253 = vset.pattern.permute.xlu0 1
        %1254 = vperm.xlu0 %1253, %v687
        %v1255 = vpop.permute.xlu0 %1254
        %v1258 = vunpack.c.l.s4 839922192
        %v1259 = vunpack.c.0.s8 %v1258
        %v1260 = vperm.slane %v1255, %v1259
        %1261 = vset.pattern.permute.xlu0 1
        %1262 = vperm.xlu0 %1261, %v688
        %v1263 = vpop.permute.xlu0 %1262
        %v1266 = vunpack.c.l.s4 839922192
        %v1267 = vunpack.c.0.s8 %v1266
        %v1268 = vperm.slane %v1263, %v1267
        %1269 = vset.pattern.permute.xlu0 1
        %1270 = vperm.xlu0 %1269, %v689
        %v1271 = vpop.permute.xlu0 %1270
        %v1274 = vunpack.c.l.s4 839922192
        %v1275 = vunpack.c.0.s8 %v1274
        %v1276 = vperm.slane %v1271, %v1275
        %1277 = vset.pattern.permute.xlu0 1
        %1278 = vperm.xlu0 %1277, %v690
        %v1279 = vpop.permute.xlu0 %1278
        %v1282 = vunpack.c.l.s4 839922192
        %v1283 = vunpack.c.0.s8 %v1282
        %v1284 = vperm.slane %v1279, %v1283
        %1285 = vset.pattern.permute.xlu0 1
        %1286 = vperm.xlu0 %1285, %v691
        %v1287 = vpop.permute.xlu0 %1286
        %v1290 = vunpack.c.l.s4 839922192
        %v1291 = vunpack.c.0.s8 %v1290
        %v1292 = vperm.slane %v1287, %v1291
        %1293 = vset.pattern.permute.xlu0 1
        %1294 = vperm.xlu0 %1293, %v692
        %v1295 = vpop.permute.xlu0 %1294
        %v1298 = vunpack.c.l.s4 839922192
        %v1299 = vunpack.c.0.s8 %v1298
        %v1300 = vperm.slane %v1295, %v1299
        %v1301 = vperm.slane %v597, 1
        %v1302 = vperm.slane %v598, 1
        %v1303 = vperm.slane %v599, 1
        %v1304 = vperm.slane %v600, 1
        %v1305 = vperm.slane %v601, 1
        %v1306 = vperm.slane %v602, 1
        %v1307 = vperm.slane %v603, 1
        %v1308 = vperm.slane %v604, 1
        %v1309 = vperm.slane %v605, 1
        %v1310 = vperm.slane %v606, 1
        %v1311 = vperm.slane %v607, 1
        %v1312 = vperm.slane %v608, 1
        %v1313 = vperm.slane %v609, 1
        %v1314 = vperm.slane %v610, 1
        %v1315 = vperm.slane %v611, 1
        %v1316 = vperm.slane %v612, 1
        %v1317 = vperm.slane %v613, 1
        %v1318 = vperm.slane %v614, 1
        %v1319 = vperm.slane %v615, 1
        %v1320 = vperm.slane %v616, 1
        %v1321 = vperm.slane %v617, 1
        %v1322 = vperm.slane %v618, 1
        %v1323 = vperm.slane %v619, 1
        %v1324 = vperm.slane %v620, 1
        %v1325 = vperm.slane %v621, 1
        %v1326 = vperm.slane %v622, 1
        %v1327 = vperm.slane %v623, 1
        %v1328 = vperm.slane %v624, 1
        %v1329 = vperm.slane %v625, 1
        %v1330 = vperm.slane %v626, 1
        %v1331 = vperm.slane %v627, 1
        %v1332 = vperm.slane %v628, 1
        %v1333 = vmul.f32 %v1052, %v1301
        %v1334 = vmul.f32 %v1060, %v1302
        %v1335 = vmul.f32 %v1068, %v1303
        %v1336 = vmul.f32 %v1076, %v1304
        %v1337 = vmul.f32 %v1084, %v1305
        %v1338 = vmul.f32 %v1092, %v1306
        %v1339 = vmul.f32 %v1100, %v1307
        %v1340 = vmul.f32 %v1108, %v1308
        %v1341 = vmul.f32 %v1116, %v1309
        %v1342 = vmul.f32 %v1124, %v1310
        %v1343 = vmul.f32 %v1132, %v1311
        %v1344 = vmul.f32 %v1140, %v1312
        %v1345 = vmul.f32 %v1148, %v1313
        %v1346 = vmul.f32 %v1156, %v1314
        %v1347 = vmul.f32 %v1164, %v1315
        %v1348 = vmul.f32 %v1172, %v1316
        %v1349 = vmul.f32 %v1180, %v1317
        %v1350 = vmul.f32 %v1188, %v1318
        %v1351 = vmul.f32 %v1196, %v1319
        %v1352 = vmul.f32 %v1204, %v1320
        %v1353 = vmul.f32 %v1212, %v1321
        %v1354 = vmul.f32 %v1220, %v1322
        %v1355 = vmul.f32 %v1228, %v1323
        %v1356 = vmul.f32 %v1236, %v1324
        %v1357 = vmul.f32 %v1244, %v1325
        %v1358 = vmul.f32 %v1252, %v1326
        %v1359 = vmul.f32 %v1260, %v1327
        %v1360 = vmul.f32 %v1268, %v1328
        %v1361 = vmul.f32 %v1276, %v1329
        %v1362 = vmul.f32 %v1284, %v1330
        %v1363 = vmul.f32 %v1292, %v1331
        %v1364 = vmul.f32 %v1300, %v1332
        %v1365 = vadd.f32 %v1013, %v1333
        %v1366 = vadd.f32 %v1014, %v1334
        %v1367 = vadd.f32 %v1015, %v1335
        %v1368 = vadd.f32 %v1016, %v1336
        %v1369 = vadd.f32 %v1017, %v1337
        %v1370 = vadd.f32 %v1018, %v1338
        %v1371 = vadd.f32 %v1019, %v1339
        %v1372 = vadd.f32 %v1020, %v1340
        %v1373 = vadd.f32 %v1021, %v1341
        %v1374 = vadd.f32 %v1022, %v1342
        %v1375 = vadd.f32 %v1023, %v1343
        %v1376 = vadd.f32 %v1024, %v1344
        %v1377 = vadd.f32 %v1025, %v1345
        %v1378 = vadd.f32 %v1026, %v1346
        %v1379 = vadd.f32 %v1027, %v1347
        %v1380 = vadd.f32 %v1028, %v1348
        %v1381 = vadd.f32 %v1029, %v1349
        %v1382 = vadd.f32 %v1030, %v1350
        %v1383 = vadd.f32 %v1031, %v1351
        %v1384 = vadd.f32 %v1032, %v1352
        %v1385 = vadd.f32 %v1033, %v1353
        %v1386 = vadd.f32 %v1034, %v1354
        %v1387 = vadd.f32 %v1035, %v1355
        %v1388 = vadd.f32 %v1036, %v1356
        %v1389 = vadd.f32 %v1037, %v1357
        %v1390 = vadd.f32 %v1038, %v1358
        %v1391 = vadd.f32 %v1039, %v1359
        %v1392 = vadd.f32 %v1040, %v1360
        %v1393 = vadd.f32 %v1041, %v1361
        %v1394 = vadd.f32 %v1042, %v1362
        %v1395 = vadd.f32 %v1043, %v1363
        %v1396 = vadd.f32 %v1044, %v1364
        %1397 = vset.pattern.permute.xlu0 2
        %1398 = vperm.xlu0 %1397, %v661
        %v1399 = vpop.permute.xlu0 %1398
        %v1402 = vunpack.c.l.s4 839922192
        %v1403 = vunpack.c.0.s8 %v1402
        %v1404 = vperm.slane %v1399, %v1403
        %1405 = vset.pattern.permute.xlu0 2
        %1406 = vperm.xlu0 %1405, %v662
        %v1407 = vpop.permute.xlu0 %1406
        %v1410 = vunpack.c.l.s4 839922192
        %v1411 = vunpack.c.0.s8 %v1410
        %v1412 = vperm.slane %v1407, %v1411
        %1413 = vset.pattern.permute.xlu0 2
        %1414 = vperm.xlu0 %1413, %v663
        %v1415 = vpop.permute.xlu0 %1414
        %v1418 = vunpack.c.l.s4 839922192
        %v1419 = vunpack.c.0.s8 %v1418
        %v1420 = vperm.slane %v1415, %v1419
        %1421 = vset.pattern.permute.xlu0 2
        %1422 = vperm.xlu0 %1421, %v664
        %v1423 = vpop.permute.xlu0 %1422
        %v1426 = vunpack.c.l.s4 839922192
        %v1427 = vunpack.c.0.s8 %v1426
        %v1428 = vperm.slane %v1423, %v1427
        %1429 = vset.pattern.permute.xlu0 2
        %1430 = vperm.xlu0 %1429, %v665
        %v1431 = vpop.permute.xlu0 %1430
        %v1434 = vunpack.c.l.s4 839922192
        %v1435 = vunpack.c.0.s8 %v1434
        %v1436 = vperm.slane %v1431, %v1435
        %1437 = vset.pattern.permute.xlu0 2
        %1438 = vperm.xlu0 %1437, %v666
        %v1439 = vpop.permute.xlu0 %1438
        %v1442 = vunpack.c.l.s4 839922192
        %v1443 = vunpack.c.0.s8 %v1442
        %v1444 = vperm.slane %v1439, %v1443
        %1445 = vset.pattern.permute.xlu0 2
        %1446 = vperm.xlu0 %1445, %v667
        %v1447 = vpop.permute.xlu0 %1446
        %v1450 = vunpack.c.l.s4 839922192
        %v1451 = vunpack.c.0.s8 %v1450
        %v1452 = vperm.slane %v1447, %v1451
        %1453 = vset.pattern.permute.xlu0 2
        %1454 = vperm.xlu0 %1453, %v668
        %v1455 = vpop.permute.xlu0 %1454
        %v1458 = vunpack.c.l.s4 839922192
        %v1459 = vunpack.c.0.s8 %v1458
        %v1460 = vperm.slane %v1455, %v1459
        %1461 = vset.pattern.permute.xlu0 2
        %1462 = vperm.xlu0 %1461, %v669
        %v1463 = vpop.permute.xlu0 %1462
        %v1466 = vunpack.c.l.s4 839922192
        %v1467 = vunpack.c.0.s8 %v1466
        %v1468 = vperm.slane %v1463, %v1467
        %1469 = vset.pattern.permute.xlu0 2
        %1470 = vperm.xlu0 %1469, %v670
        %v1471 = vpop.permute.xlu0 %1470
        %v1474 = vunpack.c.l.s4 839922192
        %v1475 = vunpack.c.0.s8 %v1474
        %v1476 = vperm.slane %v1471, %v1475
        %1477 = vset.pattern.permute.xlu0 2
        %1478 = vperm.xlu0 %1477, %v671
        %v1479 = vpop.permute.xlu0 %1478
        %v1482 = vunpack.c.l.s4 839922192
        %v1483 = vunpack.c.0.s8 %v1482
        %v1484 = vperm.slane %v1479, %v1483
        %1485 = vset.pattern.permute.xlu0 2
        %1486 = vperm.xlu0 %1485, %v672
        %v1487 = vpop.permute.xlu0 %1486
        %v1490 = vunpack.c.l.s4 839922192
        %v1491 = vunpack.c.0.s8 %v1490
        %v1492 = vperm.slane %v1487, %v1491
        %1493 = vset.pattern.permute.xlu0 2
        %1494 = vperm.xlu0 %1493, %v673
        %v1495 = vpop.permute.xlu0 %1494
        %v1498 = vunpack.c.l.s4 839922192
        %v1499 = vunpack.c.0.s8 %v1498
        %v1500 = vperm.slane %v1495, %v1499
        %1501 = vset.pattern.permute.xlu0 2
        %1502 = vperm.xlu0 %1501, %v674
        %v1503 = vpop.permute.xlu0 %1502
        %v1506 = vunpack.c.l.s4 839922192
        %v1507 = vunpack.c.0.s8 %v1506
        %v1508 = vperm.slane %v1503, %v1507
        %1509 = vset.pattern.permute.xlu0 2
        %1510 = vperm.xlu0 %1509, %v675
        %v1511 = vpop.permute.xlu0 %1510
        %v1514 = vunpack.c.l.s4 839922192
        %v1515 = vunpack.c.0.s8 %v1514
        %v1516 = vperm.slane %v1511, %v1515
        %1517 = vset.pattern.permute.xlu0 2
        %1518 = vperm.xlu0 %1517, %v676
        %v1519 = vpop.permute.xlu0 %1518
        %v1522 = vunpack.c.l.s4 839922192
        %v1523 = vunpack.c.0.s8 %v1522
        %v1524 = vperm.slane %v1519, %v1523
        %1525 = vset.pattern.permute.xlu0 2
        %1526 = vperm.xlu0 %1525, %v677
        %v1527 = vpop.permute.xlu0 %1526
        %v1530 = vunpack.c.l.s4 839922192
        %v1531 = vunpack.c.0.s8 %v1530
        %v1532 = vperm.slane %v1527, %v1531
        %1533 = vset.pattern.permute.xlu0 2
        %1534 = vperm.xlu0 %1533, %v678
        %v1535 = vpop.permute.xlu0 %1534
        %v1538 = vunpack.c.l.s4 839922192
        %v1539 = vunpack.c.0.s8 %v1538
        %v1540 = vperm.slane %v1535, %v1539
        %1541 = vset.pattern.permute.xlu0 2
        %1542 = vperm.xlu0 %1541, %v679
        %v1543 = vpop.permute.xlu0 %1542
        %v1546 = vunpack.c.l.s4 839922192
        %v1547 = vunpack.c.0.s8 %v1546
        %v1548 = vperm.slane %v1543, %v1547
        %1549 = vset.pattern.permute.xlu0 2
        %1550 = vperm.xlu0 %1549, %v680
        %v1551 = vpop.permute.xlu0 %1550
        %v1554 = vunpack.c.l.s4 839922192
        %v1555 = vunpack.c.0.s8 %v1554
        %v1556 = vperm.slane %v1551, %v1555
        %1557 = vset.pattern.permute.xlu0 2
        %1558 = vperm.xlu0 %1557, %v681
        %v1559 = vpop.permute.xlu0 %1558
        %v1562 = vunpack.c.l.s4 839922192
        %v1563 = vunpack.c.0.s8 %v1562
        %v1564 = vperm.slane %v1559, %v1563
        %1565 = vset.pattern.permute.xlu0 2
        %1566 = vperm.xlu0 %1565, %v682
        %v1567 = vpop.permute.xlu0 %1566
        %v1570 = vunpack.c.l.s4 839922192
        %v1571 = vunpack.c.0.s8 %v1570
        %v1572 = vperm.slane %v1567, %v1571
        %1573 = vset.pattern.permute.xlu0 2
        %1574 = vperm.xlu0 %1573, %v683
        %v1575 = vpop.permute.xlu0 %1574
        %v1578 = vunpack.c.l.s4 839922192
        %v1579 = vunpack.c.0.s8 %v1578
        %v1580 = vperm.slane %v1575, %v1579
        %1581 = vset.pattern.permute.xlu0 2
        %1582 = vperm.xlu0 %1581, %v684
        %v1583 = vpop.permute.xlu0 %1582
        %v1586 = vunpack.c.l.s4 839922192
        %v1587 = vunpack.c.0.s8 %v1586
        %v1588 = vperm.slane %v1583, %v1587
        %1589 = vset.pattern.permute.xlu0 2
        %1590 = vperm.xlu0 %1589, %v685
        %v1591 = vpop.permute.xlu0 %1590
        %v1594 = vunpack.c.l.s4 839922192
        %v1595 = vunpack.c.0.s8 %v1594
        %v1596 = vperm.slane %v1591, %v1595
        %1597 = vset.pattern.permute.xlu0 2
        %1598 = vperm.xlu0 %1597, %v686
        %v1599 = vpop.permute.xlu0 %1598
        %v1602 = vunpack.c.l.s4 839922192
        %v1603 = vunpack.c.0.s8 %v1602
        %v1604 = vperm.slane %v1599, %v1603
        %1605 = vset.pattern.permute.xlu0 2
        %1606 = vperm.xlu0 %1605, %v687
        %v1607 = vpop.permute.xlu0 %1606
        %v1610 = vunpack.c.l.s4 839922192
        %v1611 = vunpack.c.0.s8 %v1610
        %v1612 = vperm.slane %v1607, %v1611
        %1613 = vset.pattern.permute.xlu0 2
        %1614 = vperm.xlu0 %1613, %v688
        %v1615 = vpop.permute.xlu0 %1614
        %v1618 = vunpack.c.l.s4 839922192
        %v1619 = vunpack.c.0.s8 %v1618
        %v1620 = vperm.slane %v1615, %v1619
        %1621 = vset.pattern.permute.xlu0 2
        %1622 = vperm.xlu0 %1621, %v689
        %v1623 = vpop.permute.xlu0 %1622
        %v1626 = vunpack.c.l.s4 839922192
        %v1627 = vunpack.c.0.s8 %v1626
        %v1628 = vperm.slane %v1623, %v1627
        %1629 = vset.pattern.permute.xlu0 2
        %1630 = vperm.xlu0 %1629, %v690
        %v1631 = vpop.permute.xlu0 %1630
        %v1634 = vunpack.c.l.s4 839922192
        %v1635 = vunpack.c.0.s8 %v1634
        %v1636 = vperm.slane %v1631, %v1635
        %1637 = vset.pattern.permute.xlu0 2
        %1638 = vperm.xlu0 %1637, %v691
        %v1639 = vpop.permute.xlu0 %1638
        %v1642 = vunpack.c.l.s4 839922192
        %v1643 = vunpack.c.0.s8 %v1642
        %v1644 = vperm.slane %v1639, %v1643
        %1645 = vset.pattern.permute.xlu0 2
        %1646 = vperm.xlu0 %1645, %v692
        %v1647 = vpop.permute.xlu0 %1646
        %v1650 = vunpack.c.l.s4 839922192
        %v1651 = vunpack.c.0.s8 %v1650
        %v1652 = vperm.slane %v1647, %v1651
        %v1653 = vperm.slane %v597, 2
        %v1654 = vperm.slane %v598, 2
        %v1655 = vperm.slane %v599, 2
        %v1656 = vperm.slane %v600, 2
        %v1657 = vperm.slane %v601, 2
        %v1658 = vperm.slane %v602, 2
        %v1659 = vperm.slane %v603, 2
        %v1660 = vperm.slane %v604, 2
        %v1661 = vperm.slane %v605, 2
        %v1662 = vperm.slane %v606, 2
        %v1663 = vperm.slane %v607, 2
        %v1664 = vperm.slane %v608, 2
        %v1665 = vperm.slane %v609, 2
        %v1666 = vperm.slane %v610, 2
        %v1667 = vperm.slane %v611, 2
        %v1668 = vperm.slane %v612, 2
        %v1669 = vperm.slane %v613, 2
        %v1670 = vperm.slane %v614, 2
        %v1671 = vperm.slane %v615, 2
        %v1672 = vperm.slane %v616, 2
        %v1673 = vperm.slane %v617, 2
        %v1674 = vperm.slane %v618, 2
        %v1675 = vperm.slane %v619, 2
        %v1676 = vperm.slane %v620, 2
        %v1677 = vperm.slane %v621, 2
        %v1678 = vperm.slane %v622, 2
        %v1679 = vperm.slane %v623, 2
        %v1680 = vperm.slane %v624, 2
        %v1681 = vperm.slane %v625, 2
        %v1682 = vperm.slane %v626, 2
        %v1683 = vperm.slane %v627, 2
        %v1684 = vperm.slane %v628, 2
        %v1685 = vmul.f32 %v1404, %v1653
        %v1686 = vmul.f32 %v1412, %v1654
        %v1687 = vmul.f32 %v1420, %v1655
        %v1688 = vmul.f32 %v1428, %v1656
        %v1689 = vmul.f32 %v1436, %v1657
        %v1690 = vmul.f32 %v1444, %v1658
        %v1691 = vmul.f32 %v1452, %v1659
        %v1692 = vmul.f32 %v1460, %v1660
        %v1693 = vmul.f32 %v1468, %v1661
        %v1694 = vmul.f32 %v1476, %v1662
        %v1695 = vmul.f32 %v1484, %v1663
        %v1696 = vmul.f32 %v1492, %v1664
        %v1697 = vmul.f32 %v1500, %v1665
        %v1698 = vmul.f32 %v1508, %v1666
        %v1699 = vmul.f32 %v1516, %v1667
        %v1700 = vmul.f32 %v1524, %v1668
        %v1701 = vmul.f32 %v1532, %v1669
        %v1702 = vmul.f32 %v1540, %v1670
        %v1703 = vmul.f32 %v1548, %v1671
        %v1704 = vmul.f32 %v1556, %v1672
        %v1705 = vmul.f32 %v1564, %v1673
        %v1706 = vmul.f32 %v1572, %v1674
        %v1707 = vmul.f32 %v1580, %v1675
        %v1708 = vmul.f32 %v1588, %v1676
        %v1709 = vmul.f32 %v1596, %v1677
        %v1710 = vmul.f32 %v1604, %v1678
        %v1711 = vmul.f32 %v1612, %v1679
        %v1712 = vmul.f32 %v1620, %v1680
        %v1713 = vmul.f32 %v1628, %v1681
        %v1714 = vmul.f32 %v1636, %v1682
        %v1715 = vmul.f32 %v1644, %v1683
        %v1716 = vmul.f32 %v1652, %v1684
        %v1717 = vadd.f32 %v1365, %v1685
        %v1718 = vadd.f32 %v1366, %v1686
        %v1719 = vadd.f32 %v1367, %v1687
        %v1720 = vadd.f32 %v1368, %v1688
        %v1721 = vadd.f32 %v1369, %v1689
        %v1722 = vadd.f32 %v1370, %v1690
        %v1723 = vadd.f32 %v1371, %v1691
        %v1724 = vadd.f32 %v1372, %v1692
        %v1725 = vadd.f32 %v1373, %v1693
        %v1726 = vadd.f32 %v1374, %v1694
        %v1727 = vadd.f32 %v1375, %v1695
        %v1728 = vadd.f32 %v1376, %v1696
        %v1729 = vadd.f32 %v1377, %v1697
        %v1730 = vadd.f32 %v1378, %v1698
        %v1731 = vadd.f32 %v1379, %v1699
        %v1732 = vadd.f32 %v1380, %v1700
        %v1733 = vadd.f32 %v1381, %v1701
        %v1734 = vadd.f32 %v1382, %v1702
        %v1735 = vadd.f32 %v1383, %v1703
        %v1736 = vadd.f32 %v1384, %v1704
        %v1737 = vadd.f32 %v1385, %v1705
        %v1738 = vadd.f32 %v1386, %v1706
        %v1739 = vadd.f32 %v1387, %v1707
        %v1740 = vadd.f32 %v1388, %v1708
        %v1741 = vadd.f32 %v1389, %v1709
        %v1742 = vadd.f32 %v1390, %v1710
        %v1743 = vadd.f32 %v1391, %v1711
        %v1744 = vadd.f32 %v1392, %v1712
        %v1745 = vadd.f32 %v1393, %v1713
        %v1746 = vadd.f32 %v1394, %v1714
        %v1747 = vadd.f32 %v1395, %v1715
        %v1748 = vadd.f32 %v1396, %v1716
        %1749 = vset.pattern.permute.xlu0 3
        %1750 = vperm.xlu0 %1749, %v661
        %v1751 = vpop.permute.xlu0 %1750
        %v1754 = vunpack.c.l.s4 839922192
        %v1755 = vunpack.c.0.s8 %v1754
        %v1756 = vperm.slane %v1751, %v1755
        %1757 = vset.pattern.permute.xlu0 3
        %1758 = vperm.xlu0 %1757, %v662
        %v1759 = vpop.permute.xlu0 %1758
        %v1762 = vunpack.c.l.s4 839922192
        %v1763 = vunpack.c.0.s8 %v1762
        %v1764 = vperm.slane %v1759, %v1763
        %1765 = vset.pattern.permute.xlu0 3
        %1766 = vperm.xlu0 %1765, %v663
        %v1767 = vpop.permute.xlu0 %1766
        %v1770 = vunpack.c.l.s4 839922192
        %v1771 = vunpack.c.0.s8 %v1770
        %v1772 = vperm.slane %v1767, %v1771
        %1773 = vset.pattern.permute.xlu0 3
        %1774 = vperm.xlu0 %1773, %v664
        %v1775 = vpop.permute.xlu0 %1774
        %v1778 = vunpack.c.l.s4 839922192
        %v1779 = vunpack.c.0.s8 %v1778
        %v1780 = vperm.slane %v1775, %v1779
        %1781 = vset.pattern.permute.xlu0 3
        %1782 = vperm.xlu0 %1781, %v665
        %v1783 = vpop.permute.xlu0 %1782
        %v1786 = vunpack.c.l.s4 839922192
        %v1787 = vunpack.c.0.s8 %v1786
        %v1788 = vperm.slane %v1783, %v1787
        %1789 = vset.pattern.permute.xlu0 3
        %1790 = vperm.xlu0 %1789, %v666
        %v1791 = vpop.permute.xlu0 %1790
        %v1794 = vunpack.c.l.s4 839922192
        %v1795 = vunpack.c.0.s8 %v1794
        %v1796 = vperm.slane %v1791, %v1795
        %1797 = vset.pattern.permute.xlu0 3
        %1798 = vperm.xlu0 %1797, %v667
        %v1799 = vpop.permute.xlu0 %1798
        %v1802 = vunpack.c.l.s4 839922192
        %v1803 = vunpack.c.0.s8 %v1802
        %v1804 = vperm.slane %v1799, %v1803
        %1805 = vset.pattern.permute.xlu0 3
        %1806 = vperm.xlu0 %1805, %v668
        %v1807 = vpop.permute.xlu0 %1806
        %v1810 = vunpack.c.l.s4 839922192
        %v1811 = vunpack.c.0.s8 %v1810
        %v1812 = vperm.slane %v1807, %v1811
        %1813 = vset.pattern.permute.xlu0 3
        %1814 = vperm.xlu0 %1813, %v669
        %v1815 = vpop.permute.xlu0 %1814
        %v1818 = vunpack.c.l.s4 839922192
        %v1819 = vunpack.c.0.s8 %v1818
        %v1820 = vperm.slane %v1815, %v1819
        %1821 = vset.pattern.permute.xlu0 3
        %1822 = vperm.xlu0 %1821, %v670
        %v1823 = vpop.permute.xlu0 %1822
        %v1826 = vunpack.c.l.s4 839922192
        %v1827 = vunpack.c.0.s8 %v1826
        %v1828 = vperm.slane %v1823, %v1827
        %1829 = vset.pattern.permute.xlu0 3
        %1830 = vperm.xlu0 %1829, %v671
        %v1831 = vpop.permute.xlu0 %1830
        %v1834 = vunpack.c.l.s4 839922192
        %v1835 = vunpack.c.0.s8 %v1834
        %v1836 = vperm.slane %v1831, %v1835
        %1837 = vset.pattern.permute.xlu0 3
        %1838 = vperm.xlu0 %1837, %v672
        %v1839 = vpop.permute.xlu0 %1838
        %v1842 = vunpack.c.l.s4 839922192
        %v1843 = vunpack.c.0.s8 %v1842
        %v1844 = vperm.slane %v1839, %v1843
        %1845 = vset.pattern.permute.xlu0 3
        %1846 = vperm.xlu0 %1845, %v673
        %v1847 = vpop.permute.xlu0 %1846
        %v1850 = vunpack.c.l.s4 839922192
        %v1851 = vunpack.c.0.s8 %v1850
        %v1852 = vperm.slane %v1847, %v1851
        %1853 = vset.pattern.permute.xlu0 3
        %1854 = vperm.xlu0 %1853, %v674
        %v1855 = vpop.permute.xlu0 %1854
        %v1858 = vunpack.c.l.s4 839922192
        %v1859 = vunpack.c.0.s8 %v1858
        %v1860 = vperm.slane %v1855, %v1859
        %1861 = vset.pattern.permute.xlu0 3
        %1862 = vperm.xlu0 %1861, %v675
        %v1863 = vpop.permute.xlu0 %1862
        %v1866 = vunpack.c.l.s4 839922192
        %v1867 = vunpack.c.0.s8 %v1866
        %v1868 = vperm.slane %v1863, %v1867
        %1869 = vset.pattern.permute.xlu0 3
        %1870 = vperm.xlu0 %1869, %v676
        %v1871 = vpop.permute.xlu0 %1870
        %v1874 = vunpack.c.l.s4 839922192
        %v1875 = vunpack.c.0.s8 %v1874
        %v1876 = vperm.slane %v1871, %v1875
        %1877 = vset.pattern.permute.xlu0 3
        %1878 = vperm.xlu0 %1877, %v677
        %v1879 = vpop.permute.xlu0 %1878
        %v1882 = vunpack.c.l.s4 839922192
        %v1883 = vunpack.c.0.s8 %v1882
        %v1884 = vperm.slane %v1879, %v1883
        %1885 = vset.pattern.permute.xlu0 3
        %1886 = vperm.xlu0 %1885, %v678
        %v1887 = vpop.permute.xlu0 %1886
        %v1890 = vunpack.c.l.s4 839922192
        %v1891 = vunpack.c.0.s8 %v1890
        %v1892 = vperm.slane %v1887, %v1891
        %1893 = vset.pattern.permute.xlu0 3
        %1894 = vperm.xlu0 %1893, %v679
        %v1895 = vpop.permute.xlu0 %1894
        %v1898 = vunpack.c.l.s4 839922192
        %v1899 = vunpack.c.0.s8 %v1898
        %v1900 = vperm.slane %v1895, %v1899
        %1901 = vset.pattern.permute.xlu0 3
        %1902 = vperm.xlu0 %1901, %v680
        %v1903 = vpop.permute.xlu0 %1902
        %v1906 = vunpack.c.l.s4 839922192
        %v1907 = vunpack.c.0.s8 %v1906
        %v1908 = vperm.slane %v1903, %v1907
        %1909 = vset.pattern.permute.xlu0 3
        %1910 = vperm.xlu0 %1909, %v681
        %v1911 = vpop.permute.xlu0 %1910
        %v1914 = vunpack.c.l.s4 839922192
        %v1915 = vunpack.c.0.s8 %v1914
        %v1916 = vperm.slane %v1911, %v1915
        %1917 = vset.pattern.permute.xlu0 3
        %1918 = vperm.xlu0 %1917, %v682
        %v1919 = vpop.permute.xlu0 %1918
        %v1922 = vunpack.c.l.s4 839922192
        %v1923 = vunpack.c.0.s8 %v1922
        %v1924 = vperm.slane %v1919, %v1923
        %1925 = vset.pattern.permute.xlu0 3
        %1926 = vperm.xlu0 %1925, %v683
        %v1927 = vpop.permute.xlu0 %1926
        %v1930 = vunpack.c.l.s4 839922192
        %v1931 = vunpack.c.0.s8 %v1930
        %v1932 = vperm.slane %v1927, %v1931
        %1933 = vset.pattern.permute.xlu0 3
        %1934 = vperm.xlu0 %1933, %v684
        %v1935 = vpop.permute.xlu0 %1934
        %v1938 = vunpack.c.l.s4 839922192
        %v1939 = vunpack.c.0.s8 %v1938
        %v1940 = vperm.slane %v1935, %v1939
        %1941 = vset.pattern.permute.xlu0 3
        %1942 = vperm.xlu0 %1941, %v685
        %v1943 = vpop.permute.xlu0 %1942
        %v1946 = vunpack.c.l.s4 839922192
        %v1947 = vunpack.c.0.s8 %v1946
        %v1948 = vperm.slane %v1943, %v1947
        %1949 = vset.pattern.permute.xlu0 3
        %1950 = vperm.xlu0 %1949, %v686
        %v1951 = vpop.permute.xlu0 %1950
        %v1954 = vunpack.c.l.s4 839922192
        %v1955 = vunpack.c.0.s8 %v1954
        %v1956 = vperm.slane %v1951, %v1955
        %1957 = vset.pattern.permute.xlu0 3
        %1958 = vperm.xlu0 %1957, %v687
        %v1959 = vpop.permute.xlu0 %1958
        %v1962 = vunpack.c.l.s4 839922192
        %v1963 = vunpack.c.0.s8 %v1962
        %v1964 = vperm.slane %v1959, %v1963
        %1965 = vset.pattern.permute.xlu0 3
        %1966 = vperm.xlu0 %1965, %v688
        %v1967 = vpop.permute.xlu0 %1966
        %v1970 = vunpack.c.l.s4 839922192
        %v1971 = vunpack.c.0.s8 %v1970
        %v1972 = vperm.slane %v1967, %v1971
        %1973 = vset.pattern.permute.xlu0 3
        %1974 = vperm.xlu0 %1973, %v689
        %v1975 = vpop.permute.xlu0 %1974
        %v1978 = vunpack.c.l.s4 839922192
        %v1979 = vunpack.c.0.s8 %v1978
        %v1980 = vperm.slane %v1975, %v1979
        %1981 = vset.pattern.permute.xlu0 3
        %1982 = vperm.xlu0 %1981, %v690
        %v1983 = vpop.permute.xlu0 %1982
        %v1986 = vunpack.c.l.s4 839922192
        %v1987 = vunpack.c.0.s8 %v1986
        %v1988 = vperm.slane %v1983, %v1987
        %1989 = vset.pattern.permute.xlu0 3
        %1990 = vperm.xlu0 %1989, %v691
        %v1991 = vpop.permute.xlu0 %1990
        %v1994 = vunpack.c.l.s4 839922192
        %v1995 = vunpack.c.0.s8 %v1994
        %v1996 = vperm.slane %v1991, %v1995
        %1997 = vset.pattern.permute.xlu0 3
        %1998 = vperm.xlu0 %1997, %v692
        %v1999 = vpop.permute.xlu0 %1998
        %v2002 = vunpack.c.l.s4 839922192
        %v2003 = vunpack.c.0.s8 %v2002
        %v2004 = vperm.slane %v1999, %v2003
        %v2005 = vperm.slane %v597, 3
        %v2006 = vperm.slane %v598, 3
        %v2007 = vperm.slane %v599, 3
        %v2008 = vperm.slane %v600, 3
        %v2009 = vperm.slane %v601, 3
        %v2010 = vperm.slane %v602, 3
        %v2011 = vperm.slane %v603, 3
        %v2012 = vperm.slane %v604, 3
        %v2013 = vperm.slane %v605, 3
        %v2014 = vperm.slane %v606, 3
        %v2015 = vperm.slane %v607, 3
        %v2016 = vperm.slane %v608, 3
        %v2017 = vperm.slane %v609, 3
        %v2018 = vperm.slane %v610, 3
        %v2019 = vperm.slane %v611, 3
        %v2020 = vperm.slane %v612, 3
        %v2021 = vperm.slane %v613, 3
        %v2022 = vperm.slane %v614, 3
        %v2023 = vperm.slane %v615, 3
        %v2024 = vperm.slane %v616, 3
        %v2025 = vperm.slane %v617, 3
        %v2026 = vperm.slane %v618, 3
        %v2027 = vperm.slane %v619, 3
        %v2028 = vperm.slane %v620, 3
        %v2029 = vperm.slane %v621, 3
        %v2030 = vperm.slane %v622, 3
        %v2031 = vperm.slane %v623, 3
        %v2032 = vperm.slane %v624, 3
        %v2033 = vperm.slane %v625, 3
        %v2034 = vperm.slane %v626, 3
        %v2035 = vperm.slane %v627, 3
        %v2036 = vperm.slane %v628, 3
        %v2037 = vmul.f32 %v1756, %v2005
        %v2038 = vmul.f32 %v1764, %v2006
        %v2039 = vmul.f32 %v1772, %v2007
        %v2040 = vmul.f32 %v1780, %v2008
        %v2041 = vmul.f32 %v1788, %v2009
        %v2042 = vmul.f32 %v1796, %v2010
        %v2043 = vmul.f32 %v1804, %v2011
        %v2044 = vmul.f32 %v1812, %v2012
        %v2045 = vmul.f32 %v1820, %v2013
        %v2046 = vmul.f32 %v1828, %v2014
        %v2047 = vmul.f32 %v1836, %v2015
        %v2048 = vmul.f32 %v1844, %v2016
        %v2049 = vmul.f32 %v1852, %v2017
        %v2050 = vmul.f32 %v1860, %v2018
        %v2051 = vmul.f32 %v1868, %v2019
        %v2052 = vmul.f32 %v1876, %v2020
        %v2053 = vmul.f32 %v1884, %v2021
        %v2054 = vmul.f32 %v1892, %v2022
        %v2055 = vmul.f32 %v1900, %v2023
        %v2056 = vmul.f32 %v1908, %v2024
        %v2057 = vmul.f32 %v1916, %v2025
        %v2058 = vmul.f32 %v1924, %v2026
        %v2059 = vmul.f32 %v1932, %v2027
        %v2060 = vmul.f32 %v1940, %v2028
        %v2061 = vmul.f32 %v1948, %v2029
        %v2062 = vmul.f32 %v1956, %v2030
        %v2063 = vmul.f32 %v1964, %v2031
        %v2064 = vmul.f32 %v1972, %v2032
        %v2065 = vmul.f32 %v1980, %v2033
        %v2066 = vmul.f32 %v1988, %v2034
        %v2067 = vmul.f32 %v1996, %v2035
        %v2068 = vmul.f32 %v2004, %v2036
        %v2069 = vadd.f32 %v1717, %v2037
        %v2070 = vadd.f32 %v1718, %v2038
        %v2071 = vadd.f32 %v1719, %v2039
        %v2072 = vadd.f32 %v1720, %v2040
        %v2073 = vadd.f32 %v1721, %v2041
        %v2074 = vadd.f32 %v1722, %v2042
        %v2075 = vadd.f32 %v1723, %v2043
        %v2076 = vadd.f32 %v1724, %v2044
        %v2077 = vadd.f32 %v1725, %v2045
        %v2078 = vadd.f32 %v1726, %v2046
        %v2079 = vadd.f32 %v1727, %v2047
        %v2080 = vadd.f32 %v1728, %v2048
        %v2081 = vadd.f32 %v1729, %v2049
        %v2082 = vadd.f32 %v1730, %v2050
        %v2083 = vadd.f32 %v1731, %v2051
        %v2084 = vadd.f32 %v1732, %v2052
        %v2085 = vadd.f32 %v1733, %v2053
        %v2086 = vadd.f32 %v1734, %v2054
        %v2087 = vadd.f32 %v1735, %v2055
        %v2088 = vadd.f32 %v1736, %v2056
        %v2089 = vadd.f32 %v1737, %v2057
        %v2090 = vadd.f32 %v1738, %v2058
        %v2091 = vadd.f32 %v1739, %v2059
        %v2092 = vadd.f32 %v1740, %v2060
        %v2093 = vadd.f32 %v1741, %v2061
        %v2094 = vadd.f32 %v1742, %v2062
        %v2095 = vadd.f32 %v1743, %v2063
        %v2096 = vadd.f32 %v1744, %v2064
        %v2097 = vadd.f32 %v1745, %v2065
        %v2098 = vadd.f32 %v1746, %v2066
        %v2099 = vadd.f32 %v1747, %v2067
        %v2100 = vadd.f32 %v1748, %v2068
        %v2101 = vadd.f32 %v2069, %v447
        %v2102 = vadd.f32 %v2070, %v447
        %v2103 = vadd.f32 %v2071, %v447
        %v2104 = vadd.f32 %v2072, %v447
        %v2105 = vadd.f32 %v2073, %v447
        %v2106 = vadd.f32 %v2074, %v447
        %v2107 = vadd.f32 %v2075, %v447
        %v2108 = vadd.f32 %v2076, %v447
        %v2109 = vadd.f32 %v2077, %v447
        %v2110 = vadd.f32 %v2078, %v447
        %v2111 = vadd.f32 %v2079, %v447
        %v2112 = vadd.f32 %v2080, %v447
        %v2113 = vadd.f32 %v2081, %v447
        %v2114 = vadd.f32 %v2082, %v447
        %v2115 = vadd.f32 %v2083, %v447
        %v2116 = vadd.f32 %v2084, %v447
        %v2117 = vadd.f32 %v2085, %v447
        %v2118 = vadd.f32 %v2086, %v447
        %v2119 = vadd.f32 %v2087, %v447
        %v2120 = vadd.f32 %v2088, %v447
        %v2121 = vadd.f32 %v2089, %v447
        %v2122 = vadd.f32 %v2090, %v447
        %v2123 = vadd.f32 %v2091, %v447
        %v2124 = vadd.f32 %v2092, %v447
        %v2125 = vadd.f32 %v2093, %v447
        %v2126 = vadd.f32 %v2094, %v447
        %v2127 = vadd.f32 %v2095, %v447
        %v2128 = vadd.f32 %v2096, %v447
        %v2129 = vadd.f32 %v2097, %v447
        %v2130 = vadd.f32 %v2098, %v447
        %v2131 = vadd.f32 %v2099, %v447
        %v2132 = vadd.f32 %v2100, %v447
        %vm2133 = vcmp.gt.f32.partialorder %v2101, 0.0
        %vm2134 = vcmp.gt.f32.partialorder %v2102, 0.0
        %vm2135 = vcmp.gt.f32.partialorder %v2103, 0.0
        %vm2136 = vcmp.gt.f32.partialorder %v2104, 0.0
        %vm2137 = vcmp.gt.f32.partialorder %v2105, 0.0
        %vm2138 = vcmp.gt.f32.partialorder %v2106, 0.0
        %vm2139 = vcmp.gt.f32.partialorder %v2107, 0.0
        %vm2140 = vcmp.gt.f32.partialorder %v2108, 0.0
        %vm2141 = vcmp.gt.f32.partialorder %v2109, 0.0
        %vm2142 = vcmp.gt.f32.partialorder %v2110, 0.0
        %vm2143 = vcmp.gt.f32.partialorder %v2111, 0.0
        %vm2144 = vcmp.gt.f32.partialorder %v2112, 0.0
        %vm2145 = vcmp.gt.f32.partialorder %v2113, 0.0
        %vm2146 = vcmp.gt.f32.partialorder %v2114, 0.0
        %vm2147 = vcmp.gt.f32.partialorder %v2115, 0.0
        %vm2148 = vcmp.gt.f32.partialorder %v2116, 0.0
        %vm2149 = vcmp.gt.f32.partialorder %v2117, 0.0
        %vm2150 = vcmp.gt.f32.partialorder %v2118, 0.0
        %vm2151 = vcmp.gt.f32.partialorder %v2119, 0.0
        %vm2152 = vcmp.gt.f32.partialorder %v2120, 0.0
        %vm2153 = vcmp.gt.f32.partialorder %v2121, 0.0
        %vm2154 = vcmp.gt.f32.partialorder %v2122, 0.0
        %vm2155 = vcmp.gt.f32.partialorder %v2123, 0.0
        %vm2156 = vcmp.gt.f32.partialorder %v2124, 0.0
        %vm2157 = vcmp.gt.f32.partialorder %v2125, 0.0
        %vm2158 = vcmp.gt.f32.partialorder %v2126, 0.0
        %vm2159 = vcmp.gt.f32.partialorder %v2127, 0.0
        %vm2160 = vcmp.gt.f32.partialorder %v2128, 0.0
        %vm2161 = vcmp.gt.f32.partialorder %v2129, 0.0
        %vm2162 = vcmp.gt.f32.partialorder %v2130, 0.0
        %vm2163 = vcmp.gt.f32.partialorder %v2131, 0.0
        %vm2164 = vcmp.gt.f32.partialorder %v2132, 0.0
        %v2165 = vmul.f32 %v527, %v2101
        %v2166 = vmul.f32 %v527, %v2102
        %v2167 = vmul.f32 %v527, %v2103
        %v2168 = vmul.f32 %v527, %v2104
        %v2169 = vmul.f32 %v527, %v2105
        %v2170 = vmul.f32 %v527, %v2106
        %v2171 = vmul.f32 %v527, %v2107
        %v2172 = vmul.f32 %v527, %v2108
        %v2173 = vmul.f32 %v527, %v2109
        %v2174 = vmul.f32 %v527, %v2110
        %v2175 = vmul.f32 %v527, %v2111
        %v2176 = vmul.f32 %v527, %v2112
        %v2177 = vmul.f32 %v527, %v2113
        %v2178 = vmul.f32 %v527, %v2114
        %v2179 = vmul.f32 %v527, %v2115
        %v2180 = vmul.f32 %v527, %v2116
        %v2181 = vmul.f32 %v527, %v2117
        %v2182 = vmul.f32 %v527, %v2118
        %v2183 = vmul.f32 %v527, %v2119
        %v2184 = vmul.f32 %v527, %v2120
        %v2185 = vmul.f32 %v527, %v2121
        %v2186 = vmul.f32 %v527, %v2122
        %v2187 = vmul.f32 %v527, %v2123
        %v2188 = vmul.f32 %v527, %v2124
        %v2189 = vmul.f32 %v527, %v2125
        %v2190 = vmul.f32 %v527, %v2126
        %v2191 = vmul.f32 %v527, %v2127
        %v2192 = vmul.f32 %v527, %v2128
        %v2193 = vmul.f32 %v527, %v2129
        %v2194 = vmul.f32 %v527, %v2130
        %v2195 = vmul.f32 %v527, %v2131
        %v2196 = vmul.f32 %v527, %v2132
        %v2197 = vsel %vm2133, %v2101, %v2165
        %v2198 = vsel %vm2134, %v2102, %v2166
        %v2199 = vsel %vm2135, %v2103, %v2167
        %v2200 = vsel %vm2136, %v2104, %v2168
        %v2201 = vsel %vm2137, %v2105, %v2169
        %v2202 = vsel %vm2138, %v2106, %v2170
        %v2203 = vsel %vm2139, %v2107, %v2171
        %v2204 = vsel %vm2140, %v2108, %v2172
        %v2205 = vsel %vm2141, %v2109, %v2173
        %v2206 = vsel %vm2142, %v2110, %v2174
        %v2207 = vsel %vm2143, %v2111, %v2175
        %v2208 = vsel %vm2144, %v2112, %v2176
        %v2209 = vsel %vm2145, %v2113, %v2177
        %v2210 = vsel %vm2146, %v2114, %v2178
        %v2211 = vsel %vm2147, %v2115, %v2179
        %v2212 = vsel %vm2148, %v2116, %v2180
        %v2213 = vsel %vm2149, %v2117, %v2181
        %v2214 = vsel %vm2150, %v2118, %v2182
        %v2215 = vsel %vm2151, %v2119, %v2183
        %v2216 = vsel %vm2152, %v2120, %v2184
        %v2217 = vsel %vm2153, %v2121, %v2185
        %v2218 = vsel %vm2154, %v2122, %v2186
        %v2219 = vsel %vm2155, %v2123, %v2187
        %v2220 = vsel %vm2156, %v2124, %v2188
        %v2221 = vsel %vm2157, %v2125, %v2189
        %v2222 = vsel %vm2158, %v2126, %v2190
        %v2223 = vsel %vm2159, %v2127, %v2191
        %v2224 = vsel %vm2160, %v2128, %v2192
        %v2225 = vsel %vm2161, %v2129, %v2193
        %v2226 = vsel %vm2162, %v2130, %v2194
        %v2227 = vsel %vm2163, %v2131, %v2195
        %v2228 = vsel %vm2164, %v2132, %v2196
        %vm2229 = vcmask 519168
        %v2230 = vsel %vm2229, %v2197, 0.0
        %v2231 = vrot.slane %v2230, 4
        %v2232 = vadd.f32 %v2230, %v2231
        %v2233 = vrot.slane %v2232, 2
        %v2234 = vadd.f32 %v2232, %v2233
        %v2235 = vrot.slane %v2234, 1
        %v2236 = vadd.f32 %v2234, %v2235
        %v2237 = vsel %vm2229, %v2198, 0.0
        %v2238 = vrot.slane %v2237, 4
        %v2239 = vadd.f32 %v2237, %v2238
        %v2240 = vrot.slane %v2239, 2
        %v2241 = vadd.f32 %v2239, %v2240
        %v2242 = vrot.slane %v2241, 1
        %v2243 = vadd.f32 %v2241, %v2242
        %v2244 = vsel %vm2229, %v2199, 0.0
        %v2245 = vrot.slane %v2244, 4
        %v2246 = vadd.f32 %v2244, %v2245
        %v2247 = vrot.slane %v2246, 2
        %v2248 = vadd.f32 %v2246, %v2247
        %v2249 = vrot.slane %v2248, 1
        %v2250 = vadd.f32 %v2248, %v2249
        %v2251 = vsel %vm2229, %v2200, 0.0
        %v2252 = vrot.slane %v2251, 4
        %v2253 = vadd.f32 %v2251, %v2252
        %v2254 = vrot.slane %v2253, 2
        %v2255 = vadd.f32 %v2253, %v2254
        %v2256 = vrot.slane %v2255, 1
        %v2257 = vadd.f32 %v2255, %v2256
        %v2258 = vsel %vm2229, %v2201, 0.0
        %v2259 = vrot.slane %v2258, 4
        %v2260 = vadd.f32 %v2258, %v2259
        %v2261 = vrot.slane %v2260, 2
        %v2262 = vadd.f32 %v2260, %v2261
        %v2263 = vrot.slane %v2262, 1
        %v2264 = vadd.f32 %v2262, %v2263
        %v2265 = vsel %vm2229, %v2202, 0.0
        %v2266 = vrot.slane %v2265, 4
        %v2267 = vadd.f32 %v2265, %v2266
        %v2268 = vrot.slane %v2267, 2
        %v2269 = vadd.f32 %v2267, %v2268
        %v2270 = vrot.slane %v2269, 1
        %v2271 = vadd.f32 %v2269, %v2270
        %v2272 = vsel %vm2229, %v2203, 0.0
        %v2273 = vrot.slane %v2272, 4
        %v2274 = vadd.f32 %v2272, %v2273
        %v2275 = vrot.slane %v2274, 2
        %v2276 = vadd.f32 %v2274, %v2275
        %v2277 = vrot.slane %v2276, 1
        %v2278 = vadd.f32 %v2276, %v2277
        %v2279 = vsel %vm2229, %v2204, 0.0
        %v2280 = vrot.slane %v2279, 4
        %v2281 = vadd.f32 %v2279, %v2280
        %v2282 = vrot.slane %v2281, 2
        %v2283 = vadd.f32 %v2281, %v2282
        %v2284 = vrot.slane %v2283, 1
        %v2285 = vadd.f32 %v2283, %v2284
        %v2286 = vsel %vm2229, %v2205, 0.0
        %v2287 = vrot.slane %v2286, 4
        %v2288 = vadd.f32 %v2286, %v2287
        %v2289 = vrot.slane %v2288, 2
        %v2290 = vadd.f32 %v2288, %v2289
        %v2291 = vrot.slane %v2290, 1
        %v2292 = vadd.f32 %v2290, %v2291
        %v2293 = vsel %vm2229, %v2206, 0.0
        %v2294 = vrot.slane %v2293, 4
        %v2295 = vadd.f32 %v2293, %v2294
        %v2296 = vrot.slane %v2295, 2
        %v2297 = vadd.f32 %v2295, %v2296
        %v2298 = vrot.slane %v2297, 1
        %v2299 = vadd.f32 %v2297, %v2298
        %v2300 = vsel %vm2229, %v2207, 0.0
        %v2301 = vrot.slane %v2300, 4
        %v2302 = vadd.f32 %v2300, %v2301
        %v2303 = vrot.slane %v2302, 2
        %v2304 = vadd.f32 %v2302, %v2303
        %v2305 = vrot.slane %v2304, 1
        %v2306 = vadd.f32 %v2304, %v2305
        %v2307 = vsel %vm2229, %v2208, 0.0
        %v2308 = vrot.slane %v2307, 4
        %v2309 = vadd.f32 %v2307, %v2308
        %v2310 = vrot.slane %v2309, 2
        %v2311 = vadd.f32 %v2309, %v2310
        %v2312 = vrot.slane %v2311, 1
        %v2313 = vadd.f32 %v2311, %v2312
        %v2314 = vsel %vm2229, %v2209, 0.0
        %v2315 = vrot.slane %v2314, 4
        %v2316 = vadd.f32 %v2314, %v2315
        %v2317 = vrot.slane %v2316, 2
        %v2318 = vadd.f32 %v2316, %v2317
        %v2319 = vrot.slane %v2318, 1
        %v2320 = vadd.f32 %v2318, %v2319
        %v2321 = vsel %vm2229, %v2210, 0.0
        %v2322 = vrot.slane %v2321, 4
        %v2323 = vadd.f32 %v2321, %v2322
        %v2324 = vrot.slane %v2323, 2
        %v2325 = vadd.f32 %v2323, %v2324
        %v2326 = vrot.slane %v2325, 1
        %v2327 = vadd.f32 %v2325, %v2326
        %v2328 = vsel %vm2229, %v2211, 0.0
        %v2329 = vrot.slane %v2328, 4
        %v2330 = vadd.f32 %v2328, %v2329
        %v2331 = vrot.slane %v2330, 2
        %v2332 = vadd.f32 %v2330, %v2331
        %v2333 = vrot.slane %v2332, 1
        %v2334 = vadd.f32 %v2332, %v2333
        %v2335 = vsel %vm2229, %v2212, 0.0
        %v2336 = vrot.slane %v2335, 4
        %v2337 = vadd.f32 %v2335, %v2336
        %v2338 = vrot.slane %v2337, 2
        %v2339 = vadd.f32 %v2337, %v2338
        %v2340 = vrot.slane %v2339, 1
        %v2341 = vadd.f32 %v2339, %v2340
        %v2342 = vsel %vm2229, %v2213, 0.0
        %v2343 = vrot.slane %v2342, 4
        %v2344 = vadd.f32 %v2342, %v2343
        %v2345 = vrot.slane %v2344, 2
        %v2346 = vadd.f32 %v2344, %v2345
        %v2347 = vrot.slane %v2346, 1
        %v2348 = vadd.f32 %v2346, %v2347
        %v2349 = vsel %vm2229, %v2214, 0.0
        %v2350 = vrot.slane %v2349, 4
        %v2351 = vadd.f32 %v2349, %v2350
        %v2352 = vrot.slane %v2351, 2
        %v2353 = vadd.f32 %v2351, %v2352
        %v2354 = vrot.slane %v2353, 1
        %v2355 = vadd.f32 %v2353, %v2354
        %v2356 = vsel %vm2229, %v2215, 0.0
        %v2357 = vrot.slane %v2356, 4
        %v2358 = vadd.f32 %v2356, %v2357
        %v2359 = vrot.slane %v2358, 2
        %v2360 = vadd.f32 %v2358, %v2359
        %v2361 = vrot.slane %v2360, 1
        %v2362 = vadd.f32 %v2360, %v2361
        %v2363 = vsel %vm2229, %v2216, 0.0
        %v2364 = vrot.slane %v2363, 4
        %v2365 = vadd.f32 %v2363, %v2364
        %v2366 = vrot.slane %v2365, 2
        %v2367 = vadd.f32 %v2365, %v2366
        %v2368 = vrot.slane %v2367, 1
        %v2369 = vadd.f32 %v2367, %v2368
        %v2370 = vsel %vm2229, %v2217, 0.0
        %v2371 = vrot.slane %v2370, 4
        %v2372 = vadd.f32 %v2370, %v2371
        %v2373 = vrot.slane %v2372, 2
        %v2374 = vadd.f32 %v2372, %v2373
        %v2375 = vrot.slane %v2374, 1
        %v2376 = vadd.f32 %v2374, %v2375
        %v2377 = vsel %vm2229, %v2218, 0.0
        %v2378 = vrot.slane %v2377, 4
        %v2379 = vadd.f32 %v2377, %v2378
        %v2380 = vrot.slane %v2379, 2
        %v2381 = vadd.f32 %v2379, %v2380
        %v2382 = vrot.slane %v2381, 1
        %v2383 = vadd.f32 %v2381, %v2382
        %v2384 = vsel %vm2229, %v2219, 0.0
        %v2385 = vrot.slane %v2384, 4
        %v2386 = vadd.f32 %v2384, %v2385
        %v2387 = vrot.slane %v2386, 2
        %v2388 = vadd.f32 %v2386, %v2387
        %v2389 = vrot.slane %v2388, 1
        %v2390 = vadd.f32 %v2388, %v2389
        %v2391 = vsel %vm2229, %v2220, 0.0
        %v2392 = vrot.slane %v2391, 4
        %v2393 = vadd.f32 %v2391, %v2392
        %v2394 = vrot.slane %v2393, 2
        %v2395 = vadd.f32 %v2393, %v2394
        %v2396 = vrot.slane %v2395, 1
        %v2397 = vadd.f32 %v2395, %v2396
        %v2398 = vsel %vm2229, %v2221, 0.0
        %v2399 = vrot.slane %v2398, 4
        %v2400 = vadd.f32 %v2398, %v2399
        %v2401 = vrot.slane %v2400, 2
        %v2402 = vadd.f32 %v2400, %v2401
        %v2403 = vrot.slane %v2402, 1
        %v2404 = vadd.f32 %v2402, %v2403
        %v2405 = vsel %vm2229, %v2222, 0.0
        %v2406 = vrot.slane %v2405, 4
        %v2407 = vadd.f32 %v2405, %v2406
        %v2408 = vrot.slane %v2407, 2
        %v2409 = vadd.f32 %v2407, %v2408
        %v2410 = vrot.slane %v2409, 1
        %v2411 = vadd.f32 %v2409, %v2410
        %v2412 = vsel %vm2229, %v2223, 0.0
        %v2413 = vrot.slane %v2412, 4
        %v2414 = vadd.f32 %v2412, %v2413
        %v2415 = vrot.slane %v2414, 2
        %v2416 = vadd.f32 %v2414, %v2415
        %v2417 = vrot.slane %v2416, 1
        %v2418 = vadd.f32 %v2416, %v2417
        %v2419 = vsel %vm2229, %v2224, 0.0
        %v2420 = vrot.slane %v2419, 4
        %v2421 = vadd.f32 %v2419, %v2420
        %v2422 = vrot.slane %v2421, 2
        %v2423 = vadd.f32 %v2421, %v2422
        %v2424 = vrot.slane %v2423, 1
        %v2425 = vadd.f32 %v2423, %v2424
        %v2426 = vsel %vm2229, %v2225, 0.0
        %v2427 = vrot.slane %v2426, 4
        %v2428 = vadd.f32 %v2426, %v2427
        %v2429 = vrot.slane %v2428, 2
        %v2430 = vadd.f32 %v2428, %v2429
        %v2431 = vrot.slane %v2430, 1
        %v2432 = vadd.f32 %v2430, %v2431
        %v2433 = vsel %vm2229, %v2226, 0.0
        %v2434 = vrot.slane %v2433, 4
        %v2435 = vadd.f32 %v2433, %v2434
        %v2436 = vrot.slane %v2435, 2
        %v2437 = vadd.f32 %v2435, %v2436
        %v2438 = vrot.slane %v2437, 1
        %v2439 = vadd.f32 %v2437, %v2438
        %v2440 = vsel %vm2229, %v2227, 0.0
        %v2441 = vrot.slane %v2440, 4
        %v2442 = vadd.f32 %v2440, %v2441
        %v2443 = vrot.slane %v2442, 2
        %v2444 = vadd.f32 %v2442, %v2443
        %v2445 = vrot.slane %v2444, 1
        %v2446 = vadd.f32 %v2444, %v2445
        %v2447 = vsel %vm2229, %v2228, 0.0
        %v2448 = vrot.slane %v2447, 4
        %v2449 = vadd.f32 %v2447, %v2448
        %v2450 = vrot.slane %v2449, 2
        %v2451 = vadd.f32 %v2449, %v2450
        %v2452 = vrot.slane %v2451, 1
        %v2453 = vadd.f32 %v2451, %v2452
        %v2454 = vrcp.pop 4.0
        %v2455 = vmul.f32 4.0, %v2454
        %v2456 = vsub.f32 1.0, %v2455
        %v2457 = vmul.f32 %v2454, %v2456
        %v2458 = vadd.f32 %v2454, %v2457
        %vm2459 = vweird.f32 %v2454
        %v2460 = vsel %vm2459, %v2454, %v2458
        %v2461 = vmul.f32 %v2236, %v2460
        %v2462 = vmul.f32 %v2243, %v2460
        %v2463 = vmul.f32 %v2250, %v2460
        %v2464 = vmul.f32 %v2257, %v2460
        %v2465 = vmul.f32 %v2264, %v2460
        %v2466 = vmul.f32 %v2271, %v2460
        %v2467 = vmul.f32 %v2278, %v2460
        %v2468 = vmul.f32 %v2285, %v2460
        %v2469 = vmul.f32 %v2292, %v2460
        %v2470 = vmul.f32 %v2299, %v2460
        %v2471 = vmul.f32 %v2306, %v2460
        %v2472 = vmul.f32 %v2313, %v2460
        %v2473 = vmul.f32 %v2320, %v2460
        %v2474 = vmul.f32 %v2327, %v2460
        %v2475 = vmul.f32 %v2334, %v2460
        %v2476 = vmul.f32 %v2341, %v2460
        %v2477 = vmul.f32 %v2348, %v2460
        %v2478 = vmul.f32 %v2355, %v2460
        %v2479 = vmul.f32 %v2362, %v2460
        %v2480 = vmul.f32 %v2369, %v2460
        %v2481 = vmul.f32 %v2376, %v2460
        %v2482 = vmul.f32 %v2383, %v2460
        %v2483 = vmul.f32 %v2390, %v2460
        %v2484 = vmul.f32 %v2397, %v2460
        %v2485 = vmul.f32 %v2404, %v2460
        %v2486 = vmul.f32 %v2411, %v2460
        %v2487 = vmul.f32 %v2418, %v2460
        %v2488 = vmul.f32 %v2425, %v2460
        %v2489 = vmul.f32 %v2432, %v2460
        %v2490 = vmul.f32 %v2439, %v2460
        %v2491 = vmul.f32 %v2446, %v2460
        %v2492 = vmul.f32 %v2453, %v2460
        %v2493 = vmul.f32 %v2461, %v2461
        %v2494 = vmul.f32 %v2462, %v2462
        %v2495 = vmul.f32 %v2463, %v2463
        %v2496 = vmul.f32 %v2464, %v2464
        %v2497 = vmul.f32 %v2465, %v2465
        %v2498 = vmul.f32 %v2466, %v2466
        %v2499 = vmul.f32 %v2467, %v2467
        %v2500 = vmul.f32 %v2468, %v2468
        %v2501 = vmul.f32 %v2469, %v2469
        %v2502 = vmul.f32 %v2470, %v2470
        %v2503 = vmul.f32 %v2471, %v2471
        %v2504 = vmul.f32 %v2472, %v2472
        %v2505 = vmul.f32 %v2473, %v2473
        %v2506 = vmul.f32 %v2474, %v2474
        %v2507 = vmul.f32 %v2475, %v2475
        %v2508 = vmul.f32 %v2476, %v2476
        %v2509 = vmul.f32 %v2477, %v2477
        %v2510 = vmul.f32 %v2478, %v2478
        %v2511 = vmul.f32 %v2479, %v2479
        %v2512 = vmul.f32 %v2480, %v2480
        %v2513 = vmul.f32 %v2481, %v2481
        %v2514 = vmul.f32 %v2482, %v2482
        %v2515 = vmul.f32 %v2483, %v2483
        %v2516 = vmul.f32 %v2484, %v2484
        %v2517 = vmul.f32 %v2485, %v2485
        %v2518 = vmul.f32 %v2486, %v2486
        %v2519 = vmul.f32 %v2487, %v2487
        %v2520 = vmul.f32 %v2488, %v2488
        %v2521 = vmul.f32 %v2489, %v2489
        %v2522 = vmul.f32 %v2490, %v2490
        %v2523 = vmul.f32 %v2491, %v2491
        %v2524 = vmul.f32 %v2492, %v2492
        %vm2557 = vcmask 1041409
        %v2558 = vsel %vm2557, %v2494, %v2493
        %vm2559 = vcmask 1042434
        %v2560 = vsel %vm2559, %v2495, %v2558
        %vm2561 = vcmask 1043459
        %v2562 = vsel %vm2561, %v2496, %v2560
        %vm2563 = vcmask 1044484
        %v2564 = vsel %vm2563, %v2497, %v2562
        %vm2565 = vcmask 1045509
        %v2566 = vsel %vm2565, %v2498, %v2564
        %vm2567 = vcmask 1046534
        %v2568 = vsel %vm2567, %v2499, %v2566
        %vm2569 = vcmask 1047559
        %v2570 = vsel %vm2569, %v2500, %v2568
        %v2571 = vsel %vm2557, %v2502, %v2501
        %v2572 = vsel %vm2559, %v2503, %v2571
        %v2573 = vsel %vm2561, %v2504, %v2572
        %v2574 = vsel %vm2563, %v2505, %v2573
        %v2575 = vsel %vm2565, %v2506, %v2574
        %v2576 = vsel %vm2567, %v2507, %v2575
        %v2577 = vsel %vm2569, %v2508, %v2576
        %v2578 = vsel %vm2557, %v2510, %v2509
        %v2579 = vsel %vm2559, %v2511, %v2578
        %v2580 = vsel %vm2561, %v2512, %v2579
        %v2581 = vsel %vm2563, %v2513, %v2580
        %v2582 = vsel %vm2565, %v2514, %v2581
        %v2583 = vsel %vm2567, %v2515, %v2582
        %v2584 = vsel %vm2569, %v2516, %v2583
        %v2585 = vsel %vm2557, %v2518, %v2517
        %v2586 = vsel %vm2559, %v2519, %v2585
        %v2587 = vsel %vm2561, %v2520, %v2586
        %v2588 = vsel %vm2563, %v2521, %v2587
        %v2589 = vsel %vm2565, %v2522, %v2588
        %v2590 = vsel %vm2567, %v2523, %v2589
        %v2591 = vsel %vm2569, %v2524, %v2590
        %vm2596 = vcmask 523264
        %v2597 = vsel %vm2596, %v2570, 0.0
        %2598 = vadd.xlane.f32.xlu0 %v2597
        %v2599 = vpop.xlane.xlu0 %2598
        %v2600 = vsel %vm2596, %v2577, 0.0
        %2601 = vadd.xlane.f32.xlu0 %v2600
        %v2602 = vpop.xlane.xlu0 %2601
        %v2603 = vsel %vm2596, %v2584, 0.0
        %2604 = vadd.xlane.f32.xlu0 %v2603
        %v2605 = vpop.xlane.xlu0 %2604
        %v2606 = vsel %vm2596, %v2591, 0.0
        %2607 = vadd.xlane.f32.xlu0 %v2606
        %v2608 = vpop.xlane.xlu0 %2607
        %v2609 = vmax.f32 %v2599, 1e-24
        %v2610 = vmax.f32 %v2602, 1e-24
        %v2611 = vmax.f32 %v2605, 1e-24
        %v2612 = vmax.f32 %v2608, 1e-24
        %v2613 = vrsqrt.pop %v2609
        %v2614 = vmul.f32 %v2613, %v2609
        %v2615 = vmul.f32 %v2614, %v2613
        %v2616 = vmul.f32 0.5, %v2615
        %v2617 = vsub.f32 1.5, %v2616
        %v2618 = vmul.f32 %v2613, %v2617
        %vm2619 = vweird.f32 %v2609
        %vm2620 = vweird.f32 %v2613
        %vm2621 = vmor %vm2619, %vm2620
        %v2622 = vsel %vm2621, %v2613, %v2618
        %v2623 = vrsqrt.pop %v2610
        %v2624 = vmul.f32 %v2623, %v2610
        %v2625 = vmul.f32 %v2624, %v2623
        %v2626 = vmul.f32 0.5, %v2625
        %v2627 = vsub.f32 1.5, %v2626
        %v2628 = vmul.f32 %v2623, %v2627
        %vm2629 = vweird.f32 %v2610
        %vm2630 = vweird.f32 %v2623
        %vm2631 = vmor %vm2629, %vm2630
        %v2632 = vsel %vm2631, %v2623, %v2628
        %v2633 = vrsqrt.pop %v2611
        %v2634 = vmul.f32 %v2633, %v2611
        %v2635 = vmul.f32 %v2634, %v2633
        %v2636 = vmul.f32 0.5, %v2635
        %v2637 = vsub.f32 1.5, %v2636
        %v2638 = vmul.f32 %v2633, %v2637
        %vm2639 = vweird.f32 %v2611
        %vm2640 = vweird.f32 %v2633
        %vm2641 = vmor %vm2639, %vm2640
        %v2642 = vsel %vm2641, %v2633, %v2638
        %v2643 = vrsqrt.pop %v2612
        %v2644 = vmul.f32 %v2643, %v2612
        %v2645 = vmul.f32 %v2644, %v2643
        %v2646 = vmul.f32 0.5, %v2645
        %v2647 = vsub.f32 1.5, %v2646
        %v2648 = vmul.f32 %v2643, %v2647
        %vm2649 = vweird.f32 %v2612
        %vm2650 = vweird.f32 %v2643
        %vm2651 = vmor %vm2649, %vm2650
        %v2652 = vsel %vm2651, %v2643, %v2648
        %v2657 = vrot.slane %v2622, 1
        %v2658 = vrot.slane %v2622, 2
        %v2659 = vrot.slane %v2622, 3
        %v2660 = vrot.slane %v2622, 4
        %v2661 = vrot.slane %v2622, 5
        %v2662 = vrot.slane %v2622, 6
        %v2663 = vrot.slane %v2622, 7
        %v2664 = vrot.slane %v2632, 1
        %v2665 = vrot.slane %v2632, 2
        %v2666 = vrot.slane %v2632, 3
        %v2667 = vrot.slane %v2632, 4
        %v2668 = vrot.slane %v2632, 5
        %v2669 = vrot.slane %v2632, 6
        %v2670 = vrot.slane %v2632, 7
        %v2671 = vrot.slane %v2642, 1
        %v2672 = vrot.slane %v2642, 2
        %v2673 = vrot.slane %v2642, 3
        %v2674 = vrot.slane %v2642, 4
        %v2675 = vrot.slane %v2642, 5
        %v2676 = vrot.slane %v2642, 6
        %v2677 = vrot.slane %v2642, 7
        %v2678 = vrot.slane %v2652, 1
        %v2679 = vrot.slane %v2652, 2
        %v2680 = vrot.slane %v2652, 3
        %v2681 = vrot.slane %v2652, 4
        %v2682 = vrot.slane %v2652, 5
        %v2683 = vrot.slane %v2652, 6
        %v2684 = vrot.slane %v2652, 7
        %v2717 = vmul.f32 %v2461, %v2622
        %v2718 = vmul.f32 %v2462, %v2657
        %v2719 = vmul.f32 %v2463, %v2658
        %v2720 = vmul.f32 %v2464, %v2659
        %v2721 = vmul.f32 %v2465, %v2660
        %v2722 = vmul.f32 %v2466, %v2661
        %v2723 = vmul.f32 %v2467, %v2662
        %v2724 = vmul.f32 %v2468, %v2663
        %v2725 = vmul.f32 %v2469, %v2632
        %v2726 = vmul.f32 %v2470, %v2664
        %v2727 = vmul.f32 %v2471, %v2665
        %v2728 = vmul.f32 %v2472, %v2666
        %v2729 = vmul.f32 %v2473, %v2667
        %v2730 = vmul.f32 %v2474, %v2668
        %v2731 = vmul.f32 %v2475, %v2669
        %v2732 = vmul.f32 %v2476, %v2670
        %v2733 = vmul.f32 %v2477, %v2642
        %v2734 = vmul.f32 %v2478, %v2671
        %v2735 = vmul.f32 %v2479, %v2672
        %v2736 = vmul.f32 %v2480, %v2673
        %v2737 = vmul.f32 %v2481, %v2674
        %v2738 = vmul.f32 %v2482, %v2675
        %v2739 = vmul.f32 %v2483, %v2676
        %v2740 = vmul.f32 %v2484, %v2677
        %v2741 = vmul.f32 %v2485, %v2652
        %v2742 = vmul.f32 %v2486, %v2678
        %v2743 = vmul.f32 %v2487, %v2679
        %v2744 = vmul.f32 %v2488, %v2680
        %v2745 = vmul.f32 %v2489, %v2681
        %v2746 = vmul.f32 %v2490, %v2682
        %v2747 = vmul.f32 %v2491, %v2683
        %v2748 = vmul.f32 %v2492, %v2684
        %v2781 = vrot.slane %v2718, 7
        %v2782 = vsel %vm2557, %v2781, %v2717
        %v2783 = vrot.slane %v2719, 6
        %v2784 = vsel %vm2559, %v2783, %v2782
        %v2785 = vrot.slane %v2720, 5
        %v2786 = vsel %vm2561, %v2785, %v2784
        %v2787 = vrot.slane %v2721, 4
        %v2788 = vsel %vm2563, %v2787, %v2786
        %v2789 = vrot.slane %v2722, 3
        %v2790 = vsel %vm2565, %v2789, %v2788
        %v2791 = vrot.slane %v2723, 2
        %v2792 = vsel %vm2567, %v2791, %v2790
        %v2793 = vrot.slane %v2724, 1
        %v2794 = vsel %vm2569, %v2793, %v2792
        %v2795 = vrot.slane %v2726, 7
        %v2796 = vsel %vm2557, %v2795, %v2725
        %v2797 = vrot.slane %v2727, 6
        %v2798 = vsel %vm2559, %v2797, %v2796
        %v2799 = vrot.slane %v2728, 5
        %v2800 = vsel %vm2561, %v2799, %v2798
        %v2801 = vrot.slane %v2729, 4
        %v2802 = vsel %vm2563, %v2801, %v2800
        %v2803 = vrot.slane %v2730, 3
        %v2804 = vsel %vm2565, %v2803, %v2802
        %v2805 = vrot.slane %v2731, 2
        %v2806 = vsel %vm2567, %v2805, %v2804
        %v2807 = vrot.slane %v2732, 1
        %v2808 = vsel %vm2569, %v2807, %v2806
        %v2809 = vrot.slane %v2734, 7
        %v2810 = vsel %vm2557, %v2809, %v2733
        %v2811 = vrot.slane %v2735, 6
        %v2812 = vsel %vm2559, %v2811, %v2810
        %v2813 = vrot.slane %v2736, 5
        %v2814 = vsel %vm2561, %v2813, %v2812
        %v2815 = vrot.slane %v2737, 4
        %v2816 = vsel %vm2563, %v2815, %v2814
        %v2817 = vrot.slane %v2738, 3
        %v2818 = vsel %vm2565, %v2817, %v2816
        %v2819 = vrot.slane %v2739, 2
        %v2820 = vsel %vm2567, %v2819, %v2818
        %v2821 = vrot.slane %v2740, 1
        %v2822 = vsel %vm2569, %v2821, %v2820
        %v2823 = vrot.slane %v2742, 7
        %v2824 = vsel %vm2557, %v2823, %v2741
        %v2825 = vrot.slane %v2743, 6
        %v2826 = vsel %vm2559, %v2825, %v2824
        %v2827 = vrot.slane %v2744, 5
        %v2828 = vsel %vm2561, %v2827, %v2826
        %v2829 = vrot.slane %v2745, 4
        %v2830 = vsel %vm2563, %v2829, %v2828
        %v2831 = vrot.slane %v2746, 3
        %v2832 = vsel %vm2565, %v2831, %v2830
        %v2833 = vrot.slane %v2747, 2
        %v2834 = vsel %vm2567, %v2833, %v2832
        %v2835 = vrot.slane %v2748, 1
        %v2836 = vsel %vm2569, %v2835, %v2834
        %2841 = vst.msk [vmem:[%s235] sm:$0xff] %vm2596, %v2794
        %2842 = vst.msk [vmem:[%s235 + $0x8] sm:$0xff] %vm2596, %v2808
        %2843 = vst.msk [vmem:[%s235 + $0x10] sm:$0xff] %vm2596, %v2822
        %2844 = vst.msk [vmem:[%s235 + $0x18] sm:$0xff] %vm2596, %v2836
        %v2845 = vmul.f32 %v560, %v560
        %v2846 = vmul.f32 %v561, %v561
        %v2847 = vmul.f32 %v562, %v562
        %v2848 = vmul.f32 %v563, %v563
        %v2849 = vmul.f32 %v564, %v564
        %v2850 = vmul.f32 %v565, %v565
        %v2851 = vmul.f32 %v566, %v566
        %v2852 = vmul.f32 %v567, %v567
        %v2853 = vmul.f32 %v568, %v568
        %v2854 = vmul.f32 %v569, %v569
        %v2855 = vmul.f32 %v570, %v570
        %v2856 = vmul.f32 %v571, %v571
        %v2857 = vmul.f32 %v572, %v572
        %v2858 = vmul.f32 %v573, %v573
        %v2859 = vmul.f32 %v574, %v574
        %v2860 = vmul.f32 %v575, %v575
        %v2861 = vmul.f32 %v576, %v576
        %v2862 = vmul.f32 %v577, %v577
        %v2863 = vmul.f32 %v578, %v578
        %v2864 = vmul.f32 %v579, %v579
        %v2865 = vmul.f32 %v580, %v580
        %v2866 = vmul.f32 %v581, %v581
        %v2867 = vmul.f32 %v582, %v582
        %v2868 = vmul.f32 %v583, %v583
        %v2869 = vmul.f32 %v584, %v584
        %v2870 = vmul.f32 %v585, %v585
        %v2871 = vmul.f32 %v586, %v586
        %v2872 = vmul.f32 %v587, %v587
        %v2873 = vmul.f32 %v588, %v588
        %v2874 = vmul.f32 %v589, %v589
        %v2875 = vmul.f32 %v590, %v590
        %v2876 = vmul.f32 %v591, %v591
        %v2909 = vperm.slane %v2845, 0
        %v2910 = vperm.slane %v2846, 0
        %v2911 = vperm.slane %v2847, 0
        %v2912 = vperm.slane %v2848, 0
        %v2913 = vperm.slane %v2849, 0
        %v2914 = vperm.slane %v2850, 0
        %v2915 = vperm.slane %v2851, 0
        %v2916 = vperm.slane %v2852, 0
        %v2917 = vperm.slane %v2853, 0
        %v2918 = vperm.slane %v2854, 0
        %v2919 = vperm.slane %v2855, 0
        %v2920 = vperm.slane %v2856, 0
        %v2921 = vperm.slane %v2857, 0
        %v2922 = vperm.slane %v2858, 0
        %v2923 = vperm.slane %v2859, 0
        %v2924 = vperm.slane %v2860, 0
        %v2925 = vperm.slane %v2861, 0
        %v2926 = vperm.slane %v2862, 0
        %v2927 = vperm.slane %v2863, 0
        %v2928 = vperm.slane %v2864, 0
        %v2929 = vperm.slane %v2865, 0
        %v2930 = vperm.slane %v2866, 0
        %v2931 = vperm.slane %v2867, 0
        %v2932 = vperm.slane %v2868, 0
        %v2933 = vperm.slane %v2869, 0
        %v2934 = vperm.slane %v2870, 0
        %v2935 = vperm.slane %v2871, 0
        %v2936 = vperm.slane %v2872, 0
        %v2937 = vperm.slane %v2873, 0
        %v2938 = vperm.slane %v2874, 0
        %v2939 = vperm.slane %v2875, 0
        %v2940 = vperm.slane %v2876, 0
        %v2941 = vsel %vm2557, %v2910, %v2909
        %v2942 = vsel %vm2559, %v2911, %v2941
        %v2943 = vsel %vm2561, %v2912, %v2942
        %v2944 = vsel %vm2563, %v2913, %v2943
        %v2945 = vsel %vm2565, %v2914, %v2944
        %v2946 = vsel %vm2567, %v2915, %v2945
        %v2947 = vsel %vm2569, %v2916, %v2946
        %v2948 = vsel %vm2557, %v2918, %v2917
        %v2949 = vsel %vm2559, %v2919, %v2948
        %v2950 = vsel %vm2561, %v2920, %v2949
        %v2951 = vsel %vm2563, %v2921, %v2950
        %v2952 = vsel %vm2565, %v2922, %v2951
        %v2953 = vsel %vm2567, %v2923, %v2952
        %v2954 = vsel %vm2569, %v2924, %v2953
        %v2955 = vsel %vm2557, %v2926, %v2925
        %v2956 = vsel %vm2559, %v2927, %v2955
        %v2957 = vsel %vm2561, %v2928, %v2956
        %v2958 = vsel %vm2563, %v2929, %v2957
        %v2959 = vsel %vm2565, %v2930, %v2958
        %v2960 = vsel %vm2567, %v2931, %v2959
        %v2961 = vsel %vm2569, %v2932, %v2960
        %v2962 = vsel %vm2557, %v2934, %v2933
        %v2963 = vsel %vm2559, %v2935, %v2962
        %v2964 = vsel %vm2561, %v2936, %v2963
        %v2965 = vsel %vm2563, %v2937, %v2964
        %v2966 = vsel %vm2565, %v2938, %v2965
        %v2967 = vsel %vm2567, %v2939, %v2966
        %v2968 = vsel %vm2569, %v2940, %v2967
        %v2973 = vsel %vm2596, %v2947, 0.0
        %2974 = vadd.xlane.f32.xlu0 %v2973
        %v2975 = vpop.xlane.xlu0 %2974
        %v2976 = vsel %vm2596, %v2954, 0.0
        %2977 = vadd.xlane.f32.xlu0 %v2976
        %v2978 = vpop.xlane.xlu0 %2977
        %v2979 = vsel %vm2596, %v2961, 0.0
        %2980 = vadd.xlane.f32.xlu0 %v2979
        %v2981 = vpop.xlane.xlu0 %2980
        %v2982 = vsel %vm2596, %v2968, 0.0
        %2983 = vadd.xlane.f32.xlu0 %v2982
        %v2984 = vpop.xlane.xlu0 %2983
        %v2985 = vmax.f32 %v2975, 1e-24
        %v2986 = vmax.f32 %v2978, 1e-24
        %v2987 = vmax.f32 %v2981, 1e-24
        %v2988 = vmax.f32 %v2984, 1e-24
        %v2989 = vrsqrt.pop %v2985
        %v2990 = vmul.f32 %v2989, %v2985
        %v2991 = vmul.f32 %v2990, %v2989
        %v2992 = vmul.f32 0.5, %v2991
        %v2993 = vsub.f32 1.5, %v2992
        %v2994 = vmul.f32 %v2989, %v2993
        %vm2995 = vweird.f32 %v2985
        %vm2996 = vweird.f32 %v2989
        %vm2997 = vmor %vm2995, %vm2996
        %v2998 = vsel %vm2997, %v2989, %v2994
        %v2999 = vrsqrt.pop %v2986
        %v3000 = vmul.f32 %v2999, %v2986
        %v3001 = vmul.f32 %v3000, %v2999
        %v3002 = vmul.f32 0.5, %v3001
        %v3003 = vsub.f32 1.5, %v3002
        %v3004 = vmul.f32 %v2999, %v3003
        %vm3005 = vweird.f32 %v2986
        %vm3006 = vweird.f32 %v2999
        %vm3007 = vmor %vm3005, %vm3006
        %v3008 = vsel %vm3007, %v2999, %v3004
        %v3009 = vrsqrt.pop %v2987
        %v3010 = vmul.f32 %v3009, %v2987
        %v3011 = vmul.f32 %v3010, %v3009
        %v3012 = vmul.f32 0.5, %v3011
        %v3013 = vsub.f32 1.5, %v3012
        %v3014 = vmul.f32 %v3009, %v3013
        %vm3015 = vweird.f32 %v2987
        %vm3016 = vweird.f32 %v3009
        %vm3017 = vmor %vm3015, %vm3016
        %v3018 = vsel %vm3017, %v3009, %v3014
        %v3019 = vrsqrt.pop %v2988
        %v3020 = vmul.f32 %v3019, %v2988
        %v3021 = vmul.f32 %v3020, %v3019
        %v3022 = vmul.f32 0.5, %v3021
        %v3023 = vsub.f32 1.5, %v3022
        %v3024 = vmul.f32 %v3019, %v3023
        %vm3025 = vweird.f32 %v2988
        %vm3026 = vweird.f32 %v3019
        %vm3027 = vmor %vm3025, %vm3026
        %v3028 = vsel %vm3027, %v3019, %v3024
        %v3034 = vunpack.c.l.s4 839922192
        %v3035 = vunpack.c.0.s8 %v3034
        %v3036 = vperm.slane %v2998, %v3035
        %v3038 = vunpack.c.l.s4 1985246804
        %v3039 = vunpack.c.0.s8 %v3038
        %v3040 = vperm.slane %v2998, %v3039
        %v3042 = vunpack.c.l.s4 839922192
        %v3043 = vunpack.c.0.s8 %v3042
        %v3044 = vperm.slane %v3008, %v3043
        %v3046 = vunpack.c.l.s4 1985246804
        %v3047 = vunpack.c.0.s8 %v3046
        %v3048 = vperm.slane %v3008, %v3047
        %v3050 = vunpack.c.l.s4 839922192
        %v3051 = vunpack.c.0.s8 %v3050
        %v3052 = vperm.slane %v3018, %v3051
        %v3054 = vunpack.c.l.s4 1985246804
        %v3055 = vunpack.c.0.s8 %v3054
        %v3056 = vperm.slane %v3018, %v3055
        %v3058 = vunpack.c.l.s4 839922192
        %v3059 = vunpack.c.0.s8 %v3058
        %v3060 = vperm.slane %v3028, %v3059
        %v3062 = vunpack.c.l.s4 1985246804
        %v3063 = vunpack.c.0.s8 %v3062
        %v3064 = vperm.slane %v3028, %v3063
        %v3065 = vrot.slane %v3036, 1
        %v3066 = vrot.slane %v3036, 2
        %v3067 = vrot.slane %v3036, 3
        %v3068 = vrot.slane %v3040, 1
        %v3069 = vrot.slane %v3040, 2
        %v3070 = vrot.slane %v3040, 3
        %v3071 = vrot.slane %v3044, 1
        %v3072 = vrot.slane %v3044, 2
        %v3073 = vrot.slane %v3044, 3
        %v3074 = vrot.slane %v3048, 1
        %v3075 = vrot.slane %v3048, 2
        %v3076 = vrot.slane %v3048, 3
        %v3077 = vrot.slane %v3052, 1
        %v3078 = vrot.slane %v3052, 2
        %v3079 = vrot.slane %v3052, 3
        %v3080 = vrot.slane %v3056, 1
        %v3081 = vrot.slane %v3056, 2
        %v3082 = vrot.slane %v3056, 3
        %v3083 = vrot.slane %v3060, 1
        %v3084 = vrot.slane %v3060, 2
        %v3085 = vrot.slane %v3060, 3
        %v3086 = vrot.slane %v3064, 1
        %v3087 = vrot.slane %v3064, 2
        %v3088 = vrot.slane %v3064, 3
        %v3121 = vmul.f32 %v560, %v3036
        %v3122 = vmul.f32 %v561, %v3065
        %v3123 = vmul.f32 %v562, %v3066
        %v3124 = vmul.f32 %v563, %v3067
        %v3125 = vmul.f32 %v564, %v3040
        %v3126 = vmul.f32 %v565, %v3068
        %v3127 = vmul.f32 %v566, %v3069
        %v3128 = vmul.f32 %v567, %v3070
        %v3129 = vmul.f32 %v568, %v3044
        %v3130 = vmul.f32 %v569, %v3071
        %v3131 = vmul.f32 %v570, %v3072
        %v3132 = vmul.f32 %v571, %v3073
        %v3133 = vmul.f32 %v572, %v3048
        %v3134 = vmul.f32 %v573, %v3074
        %v3135 = vmul.f32 %v574, %v3075
        %v3136 = vmul.f32 %v575, %v3076
        %v3137 = vmul.f32 %v576, %v3052
        %v3138 = vmul.f32 %v577, %v3077
        %v3139 = vmul.f32 %v578, %v3078
        %v3140 = vmul.f32 %v579, %v3079
        %v3141 = vmul.f32 %v580, %v3056
        %v3142 = vmul.f32 %v581, %v3080
        %v3143 = vmul.f32 %v582, %v3081
        %v3144 = vmul.f32 %v583, %v3082
        %v3145 = vmul.f32 %v584, %v3060
        %v3146 = vmul.f32 %v585, %v3083
        %v3147 = vmul.f32 %v586, %v3084
        %v3148 = vmul.f32 %v587, %v3085
        %v3149 = vmul.f32 %v588, %v3064
        %v3150 = vmul.f32 %v589, %v3086
        %v3151 = vmul.f32 %v590, %v3087
        %v3152 = vmul.f32 %v591, %v3088
        %v3185 = vperm.slane %v3121, 0
        %v3186 = vperm.slane %v3122, 0
        %v3187 = vperm.slane %v3123, 0
        %v3188 = vperm.slane %v3124, 0
        %v3189 = vperm.slane %v3125, 0
        %v3190 = vperm.slane %v3126, 0
        %v3191 = vperm.slane %v3127, 0
        %v3192 = vperm.slane %v3128, 0
        %v3193 = vperm.slane %v3129, 0
        %v3194 = vperm.slane %v3130, 0
        %v3195 = vperm.slane %v3131, 0
        %v3196 = vperm.slane %v3132, 0
        %v3197 = vperm.slane %v3133, 0
        %v3198 = vperm.slane %v3134, 0
        %v3199 = vperm.slane %v3135, 0
        %v3200 = vperm.slane %v3136, 0
        %v3201 = vperm.slane %v3137, 0
        %v3202 = vperm.slane %v3138, 0
        %v3203 = vperm.slane %v3139, 0
        %v3204 = vperm.slane %v3140, 0
        %v3205 = vperm.slane %v3141, 0
        %v3206 = vperm.slane %v3142, 0
        %v3207 = vperm.slane %v3143, 0
        %v3208 = vperm.slane %v3144, 0
        %v3209 = vperm.slane %v3145, 0
        %v3210 = vperm.slane %v3146, 0
        %v3211 = vperm.slane %v3147, 0
        %v3212 = vperm.slane %v3148, 0
        %v3213 = vperm.slane %v3149, 0
        %v3214 = vperm.slane %v3150, 0
        %v3215 = vperm.slane %v3151, 0
        %v3216 = vperm.slane %v3152, 0
        %v3217 = vsel %vm2557, %v3186, %v3185
        %v3218 = vsel %vm2559, %v3187, %v3217
        %v3219 = vsel %vm2561, %v3188, %v3218
        %v3220 = vsel %vm2563, %v3189, %v3219
        %v3221 = vsel %vm2565, %v3190, %v3220
        %v3222 = vsel %vm2567, %v3191, %v3221
        %v3223 = vsel %vm2569, %v3192, %v3222
        %v3224 = vsel %vm2557, %v3194, %v3193
        %v3225 = vsel %vm2559, %v3195, %v3224
        %v3226 = vsel %vm2561, %v3196, %v3225
        %v3227 = vsel %vm2563, %v3197, %v3226
        %v3228 = vsel %vm2565, %v3198, %v3227
        %v3229 = vsel %vm2567, %v3199, %v3228
        %v3230 = vsel %vm2569, %v3200, %v3229
        %v3231 = vsel %vm2557, %v3202, %v3201
        %v3232 = vsel %vm2559, %v3203, %v3231
        %v3233 = vsel %vm2561, %v3204, %v3232
        %v3234 = vsel %vm2563, %v3205, %v3233
        %v3235 = vsel %vm2565, %v3206, %v3234
        %v3236 = vsel %vm2567, %v3207, %v3235
        %v3237 = vsel %vm2569, %v3208, %v3236
        %v3238 = vsel %vm2557, %v3210, %v3209
        %v3239 = vsel %vm2559, %v3211, %v3238
        %v3240 = vsel %vm2561, %v3212, %v3239
        %v3241 = vsel %vm2563, %v3213, %v3240
        %v3242 = vsel %vm2565, %v3214, %v3241
        %v3243 = vsel %vm2567, %v3215, %v3242
        %v3244 = vsel %vm2569, %v3216, %v3243
        %3245 = vrot.lane.b32.xlu0 %v3223, 64
        %v3246 = vpop.permute.xlu0 %3245
        %3247 = vrot.lane.b32.xlu0 %v3230, 64
        %v3248 = vpop.permute.xlu0 %3247
        %3249 = vrot.lane.b32.xlu0 %v3237, 64
        %v3250 = vpop.permute.xlu0 %3249
        %3251 = vrot.lane.b32.xlu0 %v3244, 64
        %v3252 = vpop.permute.xlu0 %3251
        %vm3257 = vcmask 1048064
        %3258 = vst.msk [vmem:[%s235] sm:$0xff] %vm3257, %v3246
        %3259 = vst.msk [vmem:[%s235 + $0x8] sm:$0xff] %vm3257, %v3248
        %3260 = vst.msk [vmem:[%s235 + $0x10] sm:$0xff] %vm3257, %v3250
        %3261 = vst.msk [vmem:[%s235 + $0x18] sm:$0xff] %vm3257, %v3252
        %s3262 = sand.u32 %s143, 1
        %s3263 = scalar_lea.sflag [#allocation4], %s3262
        %s3264 = sand.u32 %s143, 1
        %s3265 = smul.addr %s3264, 32
        %s3266 = scalar_lea.vmem [#allocation3], %s3265
        // Predicated region
        $region41: #{tpu_custom_call.1} parent=39 // pred_check
          %p3267 = pneg %p153
        $region42: #{tpu_custom_call.1} parent=39 // pred_check_branch
          %3269 = sbr.rel (%p3267) target = $region44
        $region43: #{tpu_custom_call.1} parent=39 // pred_region
          %s3270 = smul.u32 4, %s20
          %3272 = vsyncadd %s3263, 0
          %s3273 = smul.addr %s3270, 8
          %s3274 = scalar_lea.hbm %s5, %s3273
          %s3275 = sshll.u32 %s3266, 4
          %s3276 = int_to_ptr.vmem [resolvable:$true] %s3275
          %s3277 = sshll.u32 %s3274, 4
          %s3278 = int_to_ptr.hbm [resolvable:$true] %s3277
          %3283 = dma.vmem_to_hbm [thread:$0]  %s3276, 512, %s3278, %s3263, 128, 128, 8
        $region44: #{tpu_custom_call.1} parent=39 // pred_fallthru
          _
      $region40: #{tpu_custom_call.1} parent=5 // pred_fallthru
        _
      %p3284 = scmp.le.s32.totalorder 2, %s15
      // Predicated region
      $region45: #{tpu_custom_call.1} parent=5 // pred_check
        %p3285 = pneg %p3284
      $region46: #{tpu_custom_call.1} parent=5 // pred_check_branch
        %3287 = sbr.rel (%p3285) target = $region48
      $region47: #{tpu_custom_call.1} parent=5 // pred_region
        %s3288 = ssub.s32 %s15, 2
        // Predicated region
        $region49: #{tpu_custom_call.1} parent=47 // pred_check
          %p3289 = pneg %p159
        $region50: #{tpu_custom_call.1} parent=47 // pred_check_branch
          %3291 = sbr.rel (%p3289) target = $region52
        $region51: #{tpu_custom_call.1} parent=47 // pred_region
          %s3292 = sand.u32 %s144, 1
          %s3293 = scalar_lea.sflag [#allocation4], %s3292
          %s3294 = sand.u32 %s144, 1
          %s3295 = smul.addr %s3294, 32
          %s3296 = scalar_lea.vmem [#allocation3], %s3295
          %3298 = dma.done %s3293, 512
        $region52: #{tpu_custom_call.1} parent=47 // pred_fallthru
          _
      $region48: #{tpu_custom_call.1} parent=5 // pred_fallthru
        _
    $region6: #{tpu_custom_call.1} parent=1 // loop_footer
      %s19 = sadd.s32 1, %s15
    $region7: #{tpu_custom_call.1} parent=1 // loop_footer_branch
      %14 = sbr.rel target = $region3
    $region8: #{tpu_custom_call.1} parent=1 // loop_exit
      _
    %3299 = vsyncpa [#allocation4], 1
    %s3300 = scalar_lea.sflag [#allocation4], 1
    %3301 = vsyncpa %s3300, 1

</llo_original>
